<compile_context>
chip_gen: v5e
topology: v5e:2x2
jax: 0.10.0
libtpu: 0.0.40
codegen_flags: <defaults>
</compile_context>

<pallas_src>
import jax
import jax.numpy as jnp
import numpy as np
from jax.experimental import pallas as pl
from jax.experimental.pallas import tpu as pltpu

# ---- model configuration (mirrors the PyTorch script constants) ----
INPUT_SIZE = 32 * 32 * 3          # 3072
HIDDEN = 128                      # hidden_layers = [128, 128]
NUM_CLASSES = 10
BATCH = 16

_LANE = 128
_SUBLANE = 8
# bf16 x tile: 512*3072*2B = 3 MiB, double-buffered -> 6 MiB; weights (bf16,
# single-buffered) ~0.8 MiB; f32 out tiles ~0.5 MiB.  Fits the default scoped
# VMEM on all generations (16 MiB v5e, 32 MiB v6e/v7x) with headroom.
_TM_MAX = 512


def _round_up(v, m):
    return (v + m - 1) // m * m


def _cdiv(a, b):
    return (a + b - 1) // b


def mlp_kernel(x_ref, w1_ref, b1_ref, w2_ref, b2_ref, out_ref):
    # Fused hot path: two MXU matmuls (bf16 in, f32 accumulate) + bias + ReLU,
    # one VMEM round trip.
    x = x_ref[...]                                              # (TM, D) bf16
    h = jnp.dot(x, w1_ref[...], preferred_element_type=jnp.float32)
    h = jnp.maximum(h + b1_ref[...], 0.0)                       # f32 ReLU, (TM, H)
    h = h.astype(jnp.bfloat16)                                  # bf16 into 2nd MXU pass
    o = jnp.dot(h, w2_ref[...], preferred_element_type=jnp.float32)
    out_ref[...] = (o + b2_ref[...]).astype(out_ref.dtype)      # (TM, C_pad) f32


def prepare_params(w1, b1, w2, b2):
    """One-time parameter prep, hoisted out of the per-call hot path:
    cast weights to bf16, keep biases f32 (added to the f32 accumulator),
    zero-pad the classifier head to 128 lanes for unmasked, lane-dense stores."""
    c = w2.shape[1]
    cp = _round_up(c, _LANE)
    if cp != c:
        w2 = jnp.pad(w2, ((0, 0), (0, cp - c)))
        b2 = jnp.pad(b2, ((0, 0), (0, cp - c)))
    return (w1.astype(jnp.bfloat16), b1.astype(jnp.float32),
            w2.astype(jnp.bfloat16), b2.astype(jnp.float32))


def mlp_forward(x, w1, b1, w2, b2, num_classes=NUM_CLASSES):
    """x: (n, input_size). w1/w2: prepared bf16 (w2 lane-padded); b1/b2: f32."""
    n, d = x.shape
    h = w1.shape[1]
    cp = w2.shape[1]

    x = x.astype(jnp.bfloat16)            # halve the dominant HBM stream

    # Batch tiling:
    #  * tiny batch  -> one grid step (latency bound, no pipeline overhead)
    #  * mid batch   -> >= 2 parallel steps so both v7x TensorCores get work
    #  * large batch -> 512-row MXU-friendly tiles near the HBM roofline
    if n <= 128:
        tm = _round_up(n, _SUBLANE)
    elif n <= 2 * _TM_MAX:
        tm = _round_up(_cdiv(n, 2), _SUBLANE)
    else:
        tm = _TM_MAX
    grid = (_cdiv(n, tm),)
    # No jnp.pad of x: Pallas masks the ragged last block; garbage rows only
    # reach out-of-bounds output rows whose stores are dropped.

    cost = pl.CostEstimate(
        flops=2 * n * (d * h + h * cp),
        transcendentals=0,
        bytes_accessed=(n * d * 2 + d * h * 2 + h * cp * 2
                        + (h + cp) * 4 + n * cp * 4),
    )

    resident = pl.Buffered(1)             # constant index_map -> never refetched

    out = pl.pallas_call(
        mlp_kernel,
        out_shape=jax.ShapeDtypeStruct((n, cp), jnp.float32),
        grid_spec=pl.GridSpec(
            grid=grid,
            in_specs=[
                pl.BlockSpec((tm, d), lambda i: (i, 0)),                          # x tile
                pl.BlockSpec((d, h), lambda i: (0, 0), pipeline_mode=resident),   # W1
                pl.BlockSpec((1, h), lambda i: (0, 0), pipeline_mode=resident),   # b1
                pl.BlockSpec((h, cp), lambda i: (0, 0), pipeline_mode=resident),  # W2
                pl.BlockSpec((1, cp), lambda i: (0, 0), pipeline_mode=resident),  # b2
            ],
            out_specs=pl.BlockSpec((tm, cp), lambda i: (i, 0)),
        ),
        compiler_params=pltpu.CompilerParams(
            dimension_semantics=("parallel",),        # megacore / 2-TC sharding
        ),
        cost_estimate=cost,
    )(x, w1, b1, w2, b2)

    # Strip class-dim lane padding in the wrapper (cheap XLA slice).
    return out[:, :num_classes]


def init_params(key):
    """Deterministic init mimicking nn.Linear's U(-1/sqrt(fan_in), +1/sqrt(fan_in))."""
    k1, k2, k3, k4 = jax.random.split(key, 4)
    lim1 = 1.0 / np.sqrt(INPUT_SIZE)
    lim2 = 1.0 / np.sqrt(HIDDEN)
    w1 = jax.random.uniform(k1, (INPUT_SIZE, HIDDEN), jnp.float32, -lim1, lim1)
    b1 = jax.random.uniform(k2, (1, HIDDEN), jnp.float32, -lim1, lim1)
    w2 = jax.random.uniform(k3, (HIDDEN, NUM_CLASSES), jnp.float32, -lim2, lim2)
    b2 = jax.random.uniform(k4, (1, NUM_CLASSES), jnp.float32, -lim2, lim2)
    return w1, b1, w2, b2


def reference_forward(x, w1, b1, w2, b2):
    """Pure-JAX reference with the same bf16-input / f32-accumulate numerics."""
    xb = x.astype(jnp.bfloat16)
    w1b = w1.astype(jnp.bfloat16)
    w2b = w2.astype(jnp.bfloat16)
    h = jnp.maximum(jnp.dot(xb, w1b, preferred_element_type=jnp.float32) + b1, 0.0)
    hb = h.astype(jnp.bfloat16)
    return jnp.dot(hb, w2b, preferred_element_type=jnp.float32) + b2


if __name__ == "__main__":
    key = jax.random.PRNGKey(0)
    kx, kx2, kp = jax.random.split(key, 3)
    w1, b1, w2, b2 = init_params(kp)
    pw1, pb1, pw2, pb2 = prepare_params(w1, b1, w2, b2)

    # Small-batch path (single grid step).
    x = jax.random.normal(kx, (BATCH, INPUT_SIZE), jnp.float32)
    out = jax.block_until_ready(mlp_forward(x, pw1, pb1, pw2, pb2))
    assert out.shape == (BATCH, NUM_CLASSES)
    ref = reference_forward(x, w1, b1, w2, b2)
    np.testing.assert_allclose(np.asarray(out), np.asarray(ref), rtol=2e-2, atol=2e-2)

    # Ragged multi-step path (2 grid steps, masked last block, no x padding).
    x2 = jax.random.normal(kx2, (200, INPUT_SIZE), jnp.float32)
    out2 = jax.block_until_ready(mlp_forward(x2, pw1, pb1, pw2, pb2))
    assert out2.shape == (200, NUM_CLASSES)
    ref2 = reference_forward(x2, w1, b1, w2, b2)
    np.testing.assert_allclose(np.asarray(out2), np.asarray(ref2), rtol=2e-2, atol=2e-2)

    print("KERNEL_OK")
</pallas_src>

<mosaic_0001>
module attributes {stable_mosaic.version = 11 : i64} {
  func.func @mlp_kernel(%arg0: i32, %arg1: memref<16x3072xbf16, #tpu.memory_space<vmem>>, %arg2: memref<3072x128xbf16, #tpu.memory_space<vmem>>, %arg3: memref<1x128xf32, #tpu.memory_space<vmem>>, %arg4: memref<128x128xbf16, #tpu.memory_space<vmem>>, %arg5: memref<1x128xf32, #tpu.memory_space<vmem>>, %arg6: memref<16x128xf32, #tpu.memory_space<vmem>>) attributes {dimension_semantics = [#tpu.dimension_semantics<parallel>], iteration_bounds = array<i64: 1>, scalar_prefetch = 0 : i64, scratch_operands = 0 : i64, tpu.core_type = #tpu.core_type<tc>, window_params = [{transform_indices = @transform_0, window_bounds = array<i64: 16, 3072>}, {pipeline_mode = #tpu.pipeline_mode<synchronous>, transform_indices = @transform_1, window_bounds = array<i64: 3072, 128>}, {pipeline_mode = #tpu.pipeline_mode<synchronous>, transform_indices = @transform_2, window_bounds = array<i64: 1, 128>}, {pipeline_mode = #tpu.pipeline_mode<synchronous>, transform_indices = @transform_3, window_bounds = array<i64: 128, 128>}, {pipeline_mode = #tpu.pipeline_mode<synchronous>, transform_indices = @transform_4, window_bounds = array<i64: 1, 128>}, {transform_indices = @transform_5, window_bounds = array<i64: 16, 128>}]} {
    %c0 = arith.constant 0 : index
    %c0_0 = arith.constant 0 : index
    %0 = vector.load %arg1[%c0, %c0_0] : memref<16x3072xbf16, #tpu.memory_space<vmem>>, vector<16x3072xbf16>
    %c0_1 = arith.constant 0 : index
    %c0_2 = arith.constant 0 : index
    %1 = vector.load %arg2[%c0_1, %c0_2] : memref<3072x128xbf16, #tpu.memory_space<vmem>>, vector<3072x128xbf16>
    %cst = arith.constant dense<0.000000e+00> : vector<16x128xf32>
    %2 = tpu.matmul %0, %1, %cst {dimension_numbers = #tpu.dot_dimension_numbers<[1], [0], [0], [1], [0, 0, 1, 1], [], []>} : vector<16x3072xbf16>, vector<3072x128xbf16>, vector<16x128xf32> -> vector<16x128xf32>
    %c0_3 = arith.constant 0 : index
    %c0_4 = arith.constant 0 : index
    %3 = vector.load %arg3[%c0_3, %c0_4] : memref<1x128xf32, #tpu.memory_space<vmem>>, vector<1x128xf32>
    %4 = vector.broadcast %3 : vector<1x128xf32> to vector<16x128xf32>
    %5 = arith.addf %2, %4 : vector<16x128xf32>
    %cst_5 = arith.constant 0.000000e+00 : f32
    %6 = vector.broadcast %cst_5 : f32 to vector<16x128xf32>
    %7 = arith.maximumf %5, %6 : vector<16x128xf32>
    %8 = arith.truncf %7 : vector<16x128xf32> to vector<16x128xbf16>
    %c0_6 = arith.constant 0 : index
    %c0_7 = arith.constant 0 : index
    %9 = vector.load %arg4[%c0_6, %c0_7] : memref<128x128xbf16, #tpu.memory_space<vmem>>, vector<128x128xbf16>
    %cst_8 = arith.constant dense<0.000000e+00> : vector<16x128xf32>
    %10 = tpu.matmul %8, %9, %cst_8 {dimension_numbers = #tpu.dot_dimension_numbers<[1], [0], [0], [1], [0, 0, 1, 1], [], []>} : vector<16x128xbf16>, vector<128x128xbf16>, vector<16x128xf32> -> vector<16x128xf32>
    %c0_9 = arith.constant 0 : index
    %c0_10 = arith.constant 0 : index
    %11 = vector.load %arg5[%c0_9, %c0_10] : memref<1x128xf32, #tpu.memory_space<vmem>>, vector<1x128xf32>
    %12 = vector.broadcast %11 : vector<1x128xf32> to vector<16x128xf32>
    %13 = arith.addf %10, %12 : vector<16x128xf32>
    %c0_11 = arith.constant 0 : index
    %c0_12 = arith.constant 0 : index
    %14 = vector.load %arg6[%c0_11, %c0_12] : memref<16x128xf32, #tpu.memory_space<vmem>>, vector<16x128xf32>
    tpu.vector_store %arg6[%c0_11, %c0_12], %13 {strides = array<i32>} : memref<16x128xf32, #tpu.memory_space<vmem>>, vector<16x128xf32>,
    return
  }
  func.func @transform_0(%arg0: i32) -> (i32, i32) {
    %c0_i32 = arith.constant 0 : i32
    %c0_i32_0 = arith.constant 0 : i32
    return %arg0, %c0_i32 : i32, i32
  }
  func.func @transform_1(%arg0: i32) -> (i32, i32) {
    %c0_i32 = arith.constant 0 : i32
    %c0_i32_0 = arith.constant 0 : i32
    %c0_i32_1 = arith.constant 0 : i32
    return %c0_i32, %c0_i32_0 : i32, i32
  }
  func.func @transform_2(%arg0: i32) -> (i32, i32) {
    %c0_i32 = arith.constant 0 : i32
    %c0_i32_0 = arith.constant 0 : i32
    %c0_i32_1 = arith.constant 0 : i32
    return %c0_i32, %c0_i32_0 : i32, i32
  }
  func.func @transform_3(%arg0: i32) -> (i32, i32) {
    %c0_i32 = arith.constant 0 : i32
    %c0_i32_0 = arith.constant 0 : i32
    %c0_i32_1 = arith.constant 0 : i32
    return %c0_i32, %c0_i32_0 : i32, i32
  }
  func.func @transform_4(%arg0: i32) -> (i32, i32) {
    %c0_i32 = arith.constant 0 : i32
    %c0_i32_0 = arith.constant 0 : i32
    %c0_i32_1 = arith.constant 0 : i32
    return %c0_i32, %c0_i32_0 : i32, i32
  }
  func.func @transform_5(%arg0: i32) -> (i32, i32) {
    %c0_i32 = arith.constant 0 : i32
    %c0_i32_0 = arith.constant 0 : i32
    return %arg0, %c0_i32 : i32, i32
  }
}

</mosaic_0001>

<llo_original>
// kernel: tpu_custom_call.1
$region0: #{tpu_custom_call.1}
  #allocation0 [shape = 'u32[]', space=smem, size = 0x4, offset = 0x4, fixed_abs, tag = 'smem constant byte address 0x4 - core index']
  #allocation1 [shape = 'u32[72,128]{1,0:T(1,128)}', space=vmem, size = 0x9000, scoped, tag = 'internal scratch']
  %s0 = inlined_call_operand.hbm [shape: bf16[16,3072], index: 0, kind: input, shape index: {}]
  %s1 = inlined_call_operand.hbm [shape: bf16[3072,128], index: 1, kind: input, shape index: {}]
  %s2 = inlined_call_operand.vmem [shape: f32[1,128], index: 2, kind: input, shape index: {}]
  %s3 = inlined_call_operand.hbm [shape: bf16[128,128], index: 3, kind: input, shape index: {}]
  %s4 = inlined_call_operand.vmem [shape: f32[1,128], index: 4, kind: input, shape index: {}]
  %s5 = inlined_call_operand.hbm [shape: f32[16,128], index: 5, kind: output, shape index: {}]
  %s6 = sld [smem:[#allocation0]]
  $region42: #{tpu_custom_call.1} parent=0
    _
  %s8 = ssub.s32 1, %s6
  %s9 = scalar_select 0, %s8, %s6
  $region1: #{tpu_custom_call.1} parent=0
    #allocation2 [shape = 'u8[98304]{0}', space=vmem, size = 0x18000, scoped, tag = 'input window, operand 0, single buffered']
    #allocation3 [shape = 's32[1]{0}', space=sflag, size = 0x4, scoped, tag = 'scoped memory for tpu_custom_call.1']
    #allocation4 [shape = 's32[1]{0}', space=sflag, size = 0x4, scoped, tag = 'scoped memory for tpu_custom_call.1']
    #allocation5 [shape = 'u8[786432]{0}', space=vmem, size = 0xc0000, scoped, tag = 'input window, operand 1, single buffered']
    #allocation6 [shape = 's32[1]{0}', space=sflag, size = 0x4, scoped, tag = 'scoped memory for tpu_custom_call.1']
    #allocation7 [shape = 'u8[32768]{0}', space=vmem, size = 0x8000, scoped, tag = 'input window, operand 3, single buffered']
    #allocation8 [shape = 'u8[8192]{0}', space=vmem, size = 0x2000, scoped, tag = 'output window, operand 0, single buffered']
    %10 = vsyncpa [#allocation3], 0
    %11 = vsyncpa [#allocation6], 0
    %12 = vsyncpa [#allocation4], 0
    // Predicated region
    $region2: #{tpu_custom_call.1} parent=1 // pred_check
      _
    $region3: #{tpu_custom_call.1} parent=1 // pred_check_branch
      %14 = sbr.rel (0) target = $region5
    $region4: #{tpu_custom_call.1} parent=1 // pred_region
      %16 = vsyncadd [#allocation3], 0
      %s17 = sshll.u32 %s0, 4
      %s18 = int_to_ptr.hbm [resolvable:$true] %s17
      %s19 = sshll.u32 [#allocation2], 4
      %s20 = int_to_ptr.vmem [resolvable:$true] %s19
      %25 = dma.hbm_to_vmem [thread:$0]  %s18, 3072, %s20, [#allocation3], 1536, 1536, 96
    $region5: #{tpu_custom_call.1} parent=1 // pred_fallthru
      _
    // Predicated region
    $region6: #{tpu_custom_call.1} parent=1 // pred_check
      _
    $region7: #{tpu_custom_call.1} parent=1 // pred_check_branch
      %27 = sbr.rel (0) target = $region9
    $region8: #{tpu_custom_call.1} parent=1 // pred_region
      %29 = vsyncadd [#allocation6], 0
      %s30 = sshll.u32 %s1, 4
      %s31 = int_to_ptr.hbm [resolvable:$true] %s30
      %s32 = sshll.u32 [#allocation5], 4
      %s33 = int_to_ptr.vmem [resolvable:$true] %s32
      %38 = dma.hbm_to_vmem [thread:$0]  %s31, 24576, %s33, [#allocation6], 64, 64, 4
    $region9: #{tpu_custom_call.1} parent=1 // pred_fallthru
      _
    // Predicated region
    $region10: #{tpu_custom_call.1} parent=1 // pred_check
      _
    $region11: #{tpu_custom_call.1} parent=1 // pred_check_branch
      %40 = sbr.rel (0) target = $region13
    $region12: #{tpu_custom_call.1} parent=1 // pred_region
      _
    $region13: #{tpu_custom_call.1} parent=1 // pred_fallthru
      _
    // Predicated region
    $region14: #{tpu_custom_call.1} parent=1 // pred_check
      _
    $region15: #{tpu_custom_call.1} parent=1 // pred_check_branch
      %42 = sbr.rel (0) target = $region17
    $region16: #{tpu_custom_call.1} parent=1 // pred_region
      %44 = vsyncadd [#allocation6], 0
      %s45 = sshll.u32 %s3, 4
      %s46 = int_to_ptr.hbm [resolvable:$true] %s45
      %s47 = sshll.u32 [#allocation7], 4
      %s48 = int_to_ptr.vmem [resolvable:$true] %s47
      %53 = dma.hbm_to_vmem [thread:$0]  %s46, 1024, %s48, [#allocation6], 64, 64, 4
    $region17: #{tpu_custom_call.1} parent=1 // pred_fallthru
      _
    // Predicated region
    $region18: #{tpu_custom_call.1} parent=1 // pred_check
      _
    $region19: #{tpu_custom_call.1} parent=1 // pred_check_branch
      %55 = sbr.rel (0) target = $region21
    $region20: #{tpu_custom_call.1} parent=1 // pred_region
      _
    $region21: #{tpu_custom_call.1} parent=1 // pred_fallthru
      _
    // Predicated region
    $region22: #{tpu_custom_call.1} parent=1 // pred_check
      _
    $region23: #{tpu_custom_call.1} parent=1 // pred_check_branch
      %57 = sbr.rel (0) target = $region25
    $region24: #{tpu_custom_call.1} parent=1 // pred_region
      %59 = dma.done [#allocation3], 3072
    $region25: #{tpu_custom_call.1} parent=1 // pred_fallthru
      _
    // Predicated region
    $region26: #{tpu_custom_call.1} parent=1 // pred_check
      _
    $region27: #{tpu_custom_call.1} parent=1 // pred_check_branch
      %61 = sbr.rel (0) target = $region29
    $region28: #{tpu_custom_call.1} parent=1 // pred_region
      %63 = dma.done [#allocation6], 24576
    $region29: #{tpu_custom_call.1} parent=1 // pred_fallthru
      _
    // Predicated region
    $region30: #{tpu_custom_call.1} parent=1 // pred_check
      _
    $region31: #{tpu_custom_call.1} parent=1 // pred_check_branch
      %65 = sbr.rel (0) target = $region33
    $region32: #{tpu_custom_call.1} parent=1 // pred_region
      %67 = dma.done [#allocation6], 1024
    $region33: #{tpu_custom_call.1} parent=1 // pred_fallthru
      _
    %v68 = vld [vmem:[#allocation2] sm:$0xff]
    %v69 = vld [vmem:[#allocation2 + $0x8] sm:$0xff]
    %v70 = vld [vmem:[#allocation2 + $0x10] sm:$0xff]
    %v71 = vld [vmem:[#allocation2 + $0x18] sm:$0xff]
    %v72 = vld [vmem:[#allocation2 + $0x20] sm:$0xff]
    %v73 = vld [vmem:[#allocation2 + $0x28] sm:$0xff]
    %v74 = vld [vmem:[#allocation2 + $0x30] sm:$0xff]
    %v75 = vld [vmem:[#allocation2 + $0x38] sm:$0xff]
    %v76 = vld [vmem:[#allocation2 + $0x40] sm:$0xff]
    %v77 = vld [vmem:[#allocation2 + $0x48] sm:$0xff]
    %v78 = vld [vmem:[#allocation2 + $0x50] sm:$0xff]
    %v79 = vld [vmem:[#allocation2 + $0x58] sm:$0xff]
    %v80 = vld [vmem:[#allocation2 + $0x60] sm:$0xff]
    %v81 = vld [vmem:[#allocation2 + $0x68] sm:$0xff]
    %v82 = vld [vmem:[#allocation2 + $0x70] sm:$0xff]
    %v83 = vld [vmem:[#allocation2 + $0x78] sm:$0xff]
    %v84 = vld [vmem:[#allocation2 + $0x80] sm:$0xff]
    %v85 = vld [vmem:[#allocation2 + $0x88] sm:$0xff]
    %v86 = vld [vmem:[#allocation2 + $0x90] sm:$0xff]
    %v87 = vld [vmem:[#allocation2 + $0x98] sm:$0xff]
    %v88 = vld [vmem:[#allocation2 + $0xa0] sm:$0xff]
    %v89 = vld [vmem:[#allocation2 + $0xa8] sm:$0xff]
    %v90 = vld [vmem:[#allocation2 + $0xb0] sm:$0xff]
    %v91 = vld [vmem:[#allocation2 + $0xb8] sm:$0xff]
    %v92 = vld [vmem:[#allocation5] sm:$0xf]
    %v93 = vld [vmem:[#allocation5 + $0x4] sm:$0xf]
    %v94 = vld [vmem:[#allocation5 + $0x8] sm:$0xf]
    %v95 = vld [vmem:[#allocation5 + $0xc] sm:$0xf]
    %v96 = vld [vmem:[#allocation5 + $0x10] sm:$0xf]
    %v97 = vld [vmem:[#allocation5 + $0x14] sm:$0xf]
    %v98 = vld [vmem:[#allocation5 + $0x18] sm:$0xf]
    %v99 = vld [vmem:[#allocation5 + $0x1c] sm:$0xf]
    %v100 = vld [vmem:[#allocation5 + $0x20] sm:$0xf]
    %v101 = vld [vmem:[#allocation5 + $0x24] sm:$0xf]
    %v102 = vld [vmem:[#allocation5 + $0x28] sm:$0xf]
    %v103 = vld [vmem:[#allocation5 + $0x2c] sm:$0xf]
    %v104 = vld [vmem:[#allocation5 + $0x30] sm:$0xf]
    %v105 = vld [vmem:[#allocation5 + $0x34] sm:$0xf]
    %v106 = vld [vmem:[#allocation5 + $0x38] sm:$0xf]
    %v107 = vld [vmem:[#allocation5 + $0x3c] sm:$0xf]
    %v108 = vld [vmem:[#allocation5 + $0x40] sm:$0xf]
    %v109 = vld [vmem:[#allocation5 + $0x44] sm:$0xf]
    %v110 = vld [vmem:[#allocation5 + $0x48] sm:$0xf]
    %v111 = vld [vmem:[#allocation5 + $0x4c] sm:$0xf]
    %v112 = vld [vmem:[#allocation5 + $0x50] sm:$0xf]
    %v113 = vld [vmem:[#allocation5 + $0x54] sm:$0xf]
    %v114 = vld [vmem:[#allocation5 + $0x58] sm:$0xf]
    %v115 = vld [vmem:[#allocation5 + $0x5c] sm:$0xf]
    %v116 = vld [vmem:[#allocation5 + $0x60] sm:$0xf]
    %v117 = vld [vmem:[#allocation5 + $0x64] sm:$0xf]
    %v118 = vld [vmem:[#allocation5 + $0x68] sm:$0xf]
    %v119 = vld [vmem:[#allocation5 + $0x6c] sm:$0xf]
    %v120 = vld [vmem:[#allocation5 + $0x70] sm:$0xf]
    %v121 = vld [vmem:[#allocation5 + $0x74] sm:$0xf]
    %v122 = vld [vmem:[#allocation5 + $0x78] sm:$0xf]
    %v123 = vld [vmem:[#allocation5 + $0x7c] sm:$0xf]
    %v124 = vld [vmem:[#allocation5 + $0x80] sm:$0xf]
    %v125 = vld [vmem:[#allocation5 + $0x84] sm:$0xf]
    %v126 = vld [vmem:[#allocation5 + $0x88] sm:$0xf]
    %v127 = vld [vmem:[#allocation5 + $0x8c] sm:$0xf]
    %v128 = vld [vmem:[#allocation5 + $0x90] sm:$0xf]
    %v129 = vld [vmem:[#allocation5 + $0x94] sm:$0xf]
    %v130 = vld [vmem:[#allocation5 + $0x98] sm:$0xf]
    %v131 = vld [vmem:[#allocation5 + $0x9c] sm:$0xf]
    %v132 = vld [vmem:[#allocation5 + $0xa0] sm:$0xf]
    %v133 = vld [vmem:[#allocation5 + $0xa4] sm:$0xf]
    %v134 = vld [vmem:[#allocation5 + $0xa8] sm:$0xf]
    %v135 = vld [vmem:[#allocation5 + $0xac] sm:$0xf]
    %v136 = vld [vmem:[#allocation5 + $0xb0] sm:$0xf]
    %v137 = vld [vmem:[#allocation5 + $0xb4] sm:$0xf]
    %v138 = vld [vmem:[#allocation5 + $0xb8] sm:$0xf]
    %v139 = vld [vmem:[#allocation5 + $0xbc] sm:$0xf]
    %v140 = vld [vmem:[#allocation5 + $0xc0] sm:$0xf]
    %v141 = vld [vmem:[#allocation5 + $0xc4] sm:$0xf]
    %v142 = vld [vmem:[#allocation5 + $0xc8] sm:$0xf]
    %v143 = vld [vmem:[#allocation5 + $0xcc] sm:$0xf]
    %v144 = vld [vmem:[#allocation5 + $0xd0] sm:$0xf]
    %v145 = vld [vmem:[#allocation5 + $0xd4] sm:$0xf]
    %v146 = vld [vmem:[#allocation5 + $0xd8] sm:$0xf]
    %v147 = vld [vmem:[#allocation5 + $0xdc] sm:$0xf]
    %v148 = vld [vmem:[#allocation5 + $0xe0] sm:$0xf]
    %v149 = vld [vmem:[#allocation5 + $0xe4] sm:$0xf]
    %v150 = vld [vmem:[#allocation5 + $0xe8] sm:$0xf]
    %v151 = vld [vmem:[#allocation5 + $0xec] sm:$0xf]
    %v152 = vld [vmem:[#allocation5 + $0xf0] sm:$0xf]
    %v153 = vld [vmem:[#allocation5 + $0xf4] sm:$0xf]
    %v154 = vld [vmem:[#allocation5 + $0xf8] sm:$0xf]
    %v155 = vld [vmem:[#allocation5 + $0xfc] sm:$0xf]
    %v156 = vld [vmem:[#allocation5 + $0x100] sm:$0xf]
    %v157 = vld [vmem:[#allocation5 + $0x104] sm:$0xf]
    %v158 = vld [vmem:[#allocation5 + $0x108] sm:$0xf]
    %v159 = vld [vmem:[#allocation5 + $0x10c] sm:$0xf]
    %v160 = vld [vmem:[#allocation5 + $0x110] sm:$0xf]
    %v161 = vld [vmem:[#allocation5 + $0x114] sm:$0xf]
    %v162 = vld [vmem:[#allocation5 + $0x118] sm:$0xf]
    %v163 = vld [vmem:[#allocation5 + $0x11c] sm:$0xf]
    %v164 = vld [vmem:[#allocation5 + $0x120] sm:$0xf]
    %v165 = vld [vmem:[#allocation5 + $0x124] sm:$0xf]
    %v166 = vld [vmem:[#allocation5 + $0x128] sm:$0xf]
    %v167 = vld [vmem:[#allocation5 + $0x12c] sm:$0xf]
    %v168 = vld [vmem:[#allocation5 + $0x130] sm:$0xf]
    %v169 = vld [vmem:[#allocation5 + $0x134] sm:$0xf]
    %v170 = vld [vmem:[#allocation5 + $0x138] sm:$0xf]
    %v171 = vld [vmem:[#allocation5 + $0x13c] sm:$0xf]
    %v172 = vld [vmem:[#allocation5 + $0x140] sm:$0xf]
    %v173 = vld [vmem:[#allocation5 + $0x144] sm:$0xf]
    %v174 = vld [vmem:[#allocation5 + $0x148] sm:$0xf]
    %v175 = vld [vmem:[#allocation5 + $0x14c] sm:$0xf]
    %v176 = vld [vmem:[#allocation5 + $0x150] sm:$0xf]
    %v177 = vld [vmem:[#allocation5 + $0x154] sm:$0xf]
    %v178 = vld [vmem:[#allocation5 + $0x158] sm:$0xf]
    %v179 = vld [vmem:[#allocation5 + $0x15c] sm:$0xf]
    %v180 = vld [vmem:[#allocation5 + $0x160] sm:$0xf]
    %v181 = vld [vmem:[#allocation5 + $0x164] sm:$0xf]
    %v182 = vld [vmem:[#allocation5 + $0x168] sm:$0xf]
    %v183 = vld [vmem:[#allocation5 + $0x16c] sm:$0xf]
    %v184 = vld [vmem:[#allocation5 + $0x170] sm:$0xf]
    %v185 = vld [vmem:[#allocation5 + $0x174] sm:$0xf]
    %v186 = vld [vmem:[#allocation5 + $0x178] sm:$0xf]
    %v187 = vld [vmem:[#allocation5 + $0x17c] sm:$0xf]
    %v188 = vld [vmem:[#allocation5 + $0x180] sm:$0xf]
    %v189 = vld [vmem:[#allocation5 + $0x184] sm:$0xf]
    %v190 = vld [vmem:[#allocation5 + $0x188] sm:$0xf]
    %v191 = vld [vmem:[#allocation5 + $0x18c] sm:$0xf]
    %v192 = vld [vmem:[#allocation5 + $0x190] sm:$0xf]
    %v193 = vld [vmem:[#allocation5 + $0x194] sm:$0xf]
    %v194 = vld [vmem:[#allocation5 + $0x198] sm:$0xf]
    %v195 = vld [vmem:[#allocation5 + $0x19c] sm:$0xf]
    %v196 = vld [vmem:[#allocation5 + $0x1a0] sm:$0xf]
    %v197 = vld [vmem:[#allocation5 + $0x1a4] sm:$0xf]
    %v198 = vld [vmem:[#allocation5 + $0x1a8] sm:$0xf]
    %v199 = vld [vmem:[#allocation5 + $0x1ac] sm:$0xf]
    %v200 = vld [vmem:[#allocation5 + $0x1b0] sm:$0xf]
    %v201 = vld [vmem:[#allocation5 + $0x1b4] sm:$0xf]
    %v202 = vld [vmem:[#allocation5 + $0x1b8] sm:$0xf]
    %v203 = vld [vmem:[#allocation5 + $0x1bc] sm:$0xf]
    %v204 = vld [vmem:[#allocation5 + $0x1c0] sm:$0xf]
    %v205 = vld [vmem:[#allocation5 + $0x1c4] sm:$0xf]
    %v206 = vld [vmem:[#allocation5 + $0x1c8] sm:$0xf]
    %v207 = vld [vmem:[#allocation5 + $0x1cc] sm:$0xf]
    %v208 = vld [vmem:[#allocation5 + $0x1d0] sm:$0xf]
    %v209 = vld [vmem:[#allocation5 + $0x1d4] sm:$0xf]
    %v210 = vld [vmem:[#allocation5 + $0x1d8] sm:$0xf]
    %v211 = vld [vmem:[#allocation5 + $0x1dc] sm:$0xf]
    %v212 = vld [vmem:[#allocation5 + $0x1e0] sm:$0xf]
    %v213 = vld [vmem:[#allocation5 + $0x1e4] sm:$0xf]
    %v214 = vld [vmem:[#allocation5 + $0x1e8] sm:$0xf]
    %v215 = vld [vmem:[#allocation5 + $0x1ec] sm:$0xf]
    %v216 = vld [vmem:[#allocation5 + $0x1f0] sm:$0xf]
    %v217 = vld [vmem:[#allocation5 + $0x1f4] sm:$0xf]
    %v218 = vld [vmem:[#allocation5 + $0x1f8] sm:$0xf]
    %v219 = vld [vmem:[#allocation5 + $0x1fc] sm:$0xf]
    %v220 = vld [vmem:[#allocation5 + $0x200] sm:$0xf]
    %v221 = vld [vmem:[#allocation5 + $0x204] sm:$0xf]
    %v222 = vld [vmem:[#allocation5 + $0x208] sm:$0xf]
    %v223 = vld [vmem:[#allocation5 + $0x20c] sm:$0xf]
    %v224 = vld [vmem:[#allocation5 + $0x210] sm:$0xf]
    %v225 = vld [vmem:[#allocation5 + $0x214] sm:$0xf]
    %v226 = vld [vmem:[#allocation5 + $0x218] sm:$0xf]
    %v227 = vld [vmem:[#allocation5 + $0x21c] sm:$0xf]
    %v228 = vld [vmem:[#allocation5 + $0x220] sm:$0xf]
    %v229 = vld [vmem:[#allocation5 + $0x224] sm:$0xf]
    %v230 = vld [vmem:[#allocation5 + $0x228] sm:$0xf]
    %v231 = vld [vmem:[#allocation5 + $0x22c] sm:$0xf]
    %v232 = vld [vmem:[#allocation5 + $0x230] sm:$0xf]
    %v233 = vld [vmem:[#allocation5 + $0x234] sm:$0xf]
    %v234 = vld [vmem:[#allocation5 + $0x238] sm:$0xf]
    %v235 = vld [vmem:[#allocation5 + $0x23c] sm:$0xf]
    %v236 = vld [vmem:[#allocation5 + $0x240] sm:$0xf]
    %v237 = vld [vmem:[#allocation5 + $0x244] sm:$0xf]
    %v238 = vld [vmem:[#allocation5 + $0x248] sm:$0xf]
    %v239 = vld [vmem:[#allocation5 + $0x24c] sm:$0xf]
    %v240 = vld [vmem:[#allocation5 + $0x250] sm:$0xf]
    %v241 = vld [vmem:[#allocation5 + $0x254] sm:$0xf]
    %v242 = vld [vmem:[#allocation5 + $0x258] sm:$0xf]
    %v243 = vld [vmem:[#allocation5 + $0x25c] sm:$0xf]
    %v244 = vld [vmem:[#allocation5 + $0x260] sm:$0xf]
    %v245 = vld [vmem:[#allocation5 + $0x264] sm:$0xf]
    %v246 = vld [vmem:[#allocation5 + $0x268] sm:$0xf]
    %v247 = vld [vmem:[#allocation5 + $0x26c] sm:$0xf]
    %v248 = vld [vmem:[#allocation5 + $0x270] sm:$0xf]
    %v249 = vld [vmem:[#allocation5 + $0x274] sm:$0xf]
    %v250 = vld [vmem:[#allocation5 + $0x278] sm:$0xf]
    %v251 = vld [vmem:[#allocation5 + $0x27c] sm:$0xf]
    %v252 = vld [vmem:[#allocation5 + $0x280] sm:$0xf]
    %v253 = vld [vmem:[#allocation5 + $0x284] sm:$0xf]
    %v254 = vld [vmem:[#allocation5 + $0x288] sm:$0xf]
    %v255 = vld [vmem:[#allocation5 + $0x28c] sm:$0xf]
    %v256 = vld [vmem:[#allocation5 + $0x290] sm:$0xf]
    %v257 = vld [vmem:[#allocation5 + $0x294] sm:$0xf]
    %v258 = vld [vmem:[#allocation5 + $0x298] sm:$0xf]
    %v259 = vld [vmem:[#allocation5 + $0x29c] sm:$0xf]
    %v260 = vld [vmem:[#allocation5 + $0x2a0] sm:$0xf]
    %v261 = vld [vmem:[#allocation5 + $0x2a4] sm:$0xf]
    %v262 = vld [vmem:[#allocation5 + $0x2a8] sm:$0xf]
    %v263 = vld [vmem:[#allocation5 + $0x2ac] sm:$0xf]
    %v264 = vld [vmem:[#allocation5 + $0x2b0] sm:$0xf]
    %v265 = vld [vmem:[#allocation5 + $0x2b4] sm:$0xf]
    %v266 = vld [vmem:[#allocation5 + $0x2b8] sm:$0xf]
    %v267 = vld [vmem:[#allocation5 + $0x2bc] sm:$0xf]
    %v268 = vld [vmem:[#allocation5 + $0x2c0] sm:$0xf]
    %v269 = vld [vmem:[#allocation5 + $0x2c4] sm:$0xf]
    %v270 = vld [vmem:[#allocation5 + $0x2c8] sm:$0xf]
    %v271 = vld [vmem:[#allocation5 + $0x2cc] sm:$0xf]
    %v272 = vld [vmem:[#allocation5 + $0x2d0] sm:$0xf]
    %v273 = vld [vmem:[#allocation5 + $0x2d4] sm:$0xf]
    %v274 = vld [vmem:[#allocation5 + $0x2d8] sm:$0xf]
    %v275 = vld [vmem:[#allocation5 + $0x2dc] sm:$0xf]
    %v276 = vld [vmem:[#allocation5 + $0x2e0] sm:$0xf]
    %v277 = vld [vmem:[#allocation5 + $0x2e4] sm:$0xf]
    %v278 = vld [vmem:[#allocation5 + $0x2e8] sm:$0xf]
    %v279 = vld [vmem:[#allocation5 + $0x2ec] sm:$0xf]
    %v280 = vld [vmem:[#allocation5 + $0x2f0] sm:$0xf]
    %v281 = vld [vmem:[#allocation5 + $0x2f4] sm:$0xf]
    %v282 = vld [vmem:[#allocation5 + $0x2f8] sm:$0xf]
    %v283 = vld [vmem:[#allocation5 + $0x2fc] sm:$0xf]
    %v284 = vld [vmem:[#allocation5 + $0x300] sm:$0xf]
    %v285 = vld [vmem:[#allocation5 + $0x304] sm:$0xf]
    %v286 = vld [vmem:[#allocation5 + $0x308] sm:$0xf]
    %v287 = vld [vmem:[#allocation5 + $0x30c] sm:$0xf]
    %v288 = vld [vmem:[#allocation5 + $0x310] sm:$0xf]
    %v289 = vld [vmem:[#allocation5 + $0x314] sm:$0xf]
    %v290 = vld [vmem:[#allocation5 + $0x318] sm:$0xf]
    %v291 = vld [vmem:[#allocation5 + $0x31c] sm:$0xf]
    %v292 = vld [vmem:[#allocation5 + $0x320] sm:$0xf]
    %v293 = vld [vmem:[#allocation5 + $0x324] sm:$0xf]
    %v294 = vld [vmem:[#allocation5 + $0x328] sm:$0xf]
    %v295 = vld [vmem:[#allocation5 + $0x32c] sm:$0xf]
    %v296 = vld [vmem:[#allocation5 + $0x330] sm:$0xf]
    %v297 = vld [vmem:[#allocation5 + $0x334] sm:$0xf]
    %v298 = vld [vmem:[#allocation5 + $0x338] sm:$0xf]
    %v299 = vld [vmem:[#allocation5 + $0x33c] sm:$0xf]
    %v300 = vld [vmem:[#allocation5 + $0x340] sm:$0xf]
    %v301 = vld [vmem:[#allocation5 + $0x344] sm:$0xf]
    %v302 = vld [vmem:[#allocation5 + $0x348] sm:$0xf]
    %v303 = vld [vmem:[#allocation5 + $0x34c] sm:$0xf]
    %v304 = vld [vmem:[#allocation5 + $0x350] sm:$0xf]
    %v305 = vld [vmem:[#allocation5 + $0x354] sm:$0xf]
    %v306 = vld [vmem:[#allocation5 + $0x358] sm:$0xf]
    %v307 = vld [vmem:[#allocation5 + $0x35c] sm:$0xf]
    %v308 = vld [vmem:[#allocation5 + $0x360] sm:$0xf]
    %v309 = vld [vmem:[#allocation5 + $0x364] sm:$0xf]
    %v310 = vld [vmem:[#allocation5 + $0x368] sm:$0xf]
    %v311 = vld [vmem:[#allocation5 + $0x36c] sm:$0xf]
    %v312 = vld [vmem:[#allocation5 + $0x370] sm:$0xf]
    %v313 = vld [vmem:[#allocation5 + $0x374] sm:$0xf]
    %v314 = vld [vmem:[#allocation5 + $0x378] sm:$0xf]
    %v315 = vld [vmem:[#allocation5 + $0x37c] sm:$0xf]
    %v316 = vld [vmem:[#allocation5 + $0x380] sm:$0xf]
    %v317 = vld [vmem:[#allocation5 + $0x384] sm:$0xf]
    %v318 = vld [vmem:[#allocation5 + $0x388] sm:$0xf]
    %v319 = vld [vmem:[#allocation5 + $0x38c] sm:$0xf]
    %v320 = vld [vmem:[#allocation5 + $0x390] sm:$0xf]
    %v321 = vld [vmem:[#allocation5 + $0x394] sm:$0xf]
    %v322 = vld [vmem:[#allocation5 + $0x398] sm:$0xf]
    %v323 = vld [vmem:[#allocation5 + $0x39c] sm:$0xf]
    %v324 = vld [vmem:[#allocation5 + $0x3a0] sm:$0xf]
    %v325 = vld [vmem:[#allocation5 + $0x3a4] sm:$0xf]
    %v326 = vld [vmem:[#allocation5 + $0x3a8] sm:$0xf]
    %v327 = vld [vmem:[#allocation5 + $0x3ac] sm:$0xf]
    %v328 = vld [vmem:[#allocation5 + $0x3b0] sm:$0xf]
    %v329 = vld [vmem:[#allocation5 + $0x3b4] sm:$0xf]
    %v330 = vld [vmem:[#allocation5 + $0x3b8] sm:$0xf]
    %v331 = vld [vmem:[#allocation5 + $0x3bc] sm:$0xf]
    %v332 = vld [vmem:[#allocation5 + $0x3c0] sm:$0xf]
    %v333 = vld [vmem:[#allocation5 + $0x3c4] sm:$0xf]
    %v334 = vld [vmem:[#allocation5 + $0x3c8] sm:$0xf]
    %v335 = vld [vmem:[#allocation5 + $0x3cc] sm:$0xf]
    %v336 = vld [vmem:[#allocation5 + $0x3d0] sm:$0xf]
    %v337 = vld [vmem:[#allocation5 + $0x3d4] sm:$0xf]
    %v338 = vld [vmem:[#allocation5 + $0x3d8] sm:$0xf]
    %v339 = vld [vmem:[#allocation5 + $0x3dc] sm:$0xf]
    %v340 = vld [vmem:[#allocation5 + $0x3e0] sm:$0xf]
    %v341 = vld [vmem:[#allocation5 + $0x3e4] sm:$0xf]
    %v342 = vld [vmem:[#allocation5 + $0x3e8] sm:$0xf]
    %v343 = vld [vmem:[#allocation5 + $0x3ec] sm:$0xf]
    %v344 = vld [vmem:[#allocation5 + $0x3f0] sm:$0xf]
    %v345 = vld [vmem:[#allocation5 + $0x3f4] sm:$0xf]
    %v346 = vld [vmem:[#allocation5 + $0x3f8] sm:$0xf]
    %v347 = vld [vmem:[#allocation5 + $0x3fc] sm:$0xf]
    %v348 = vld [vmem:[#allocation5 + $0x400] sm:$0xf]
    %v349 = vld [vmem:[#allocation5 + $0x404] sm:$0xf]
    %v350 = vld [vmem:[#allocation5 + $0x408] sm:$0xf]
    %v351 = vld [vmem:[#allocation5 + $0x40c] sm:$0xf]
    %v352 = vld [vmem:[#allocation5 + $0x410] sm:$0xf]
    %v353 = vld [vmem:[#allocation5 + $0x414] sm:$0xf]
    %v354 = vld [vmem:[#allocation5 + $0x418] sm:$0xf]
    %v355 = vld [vmem:[#allocation5 + $0x41c] sm:$0xf]
    %v356 = vld [vmem:[#allocation5 + $0x420] sm:$0xf]
    %v357 = vld [vmem:[#allocation5 + $0x424] sm:$0xf]
    %v358 = vld [vmem:[#allocation5 + $0x428] sm:$0xf]
    %v359 = vld [vmem:[#allocation5 + $0x42c] sm:$0xf]
    %v360 = vld [vmem:[#allocation5 + $0x430] sm:$0xf]
    %v361 = vld [vmem:[#allocation5 + $0x434] sm:$0xf]
    %v362 = vld [vmem:[#allocation5 + $0x438] sm:$0xf]
    %v363 = vld [vmem:[#allocation5 + $0x43c] sm:$0xf]
    %v364 = vld [vmem:[#allocation5 + $0x440] sm:$0xf]
    %v365 = vld [vmem:[#allocation5 + $0x444] sm:$0xf]
    %v366 = vld [vmem:[#allocation5 + $0x448] sm:$0xf]
    %v367 = vld [vmem:[#allocation5 + $0x44c] sm:$0xf]
    %v368 = vld [vmem:[#allocation5 + $0x450] sm:$0xf]
    %v369 = vld [vmem:[#allocation5 + $0x454] sm:$0xf]
    %v370 = vld [vmem:[#allocation5 + $0x458] sm:$0xf]
    %v371 = vld [vmem:[#allocation5 + $0x45c] sm:$0xf]
    %v372 = vld [vmem:[#allocation5 + $0x460] sm:$0xf]
    %v373 = vld [vmem:[#allocation5 + $0x464] sm:$0xf]
    %v374 = vld [vmem:[#allocation5 + $0x468] sm:$0xf]
    %v375 = vld [vmem:[#allocation5 + $0x46c] sm:$0xf]
    %v376 = vld [vmem:[#allocation5 + $0x470] sm:$0xf]
    %v377 = vld [vmem:[#allocation5 + $0x474] sm:$0xf]
    %v378 = vld [vmem:[#allocation5 + $0x478] sm:$0xf]
    %v379 = vld [vmem:[#allocation5 + $0x47c] sm:$0xf]
    %v380 = vld [vmem:[#allocation5 + $0x480] sm:$0xf]
    %v381 = vld [vmem:[#allocation5 + $0x484] sm:$0xf]
    %v382 = vld [vmem:[#allocation5 + $0x488] sm:$0xf]
    %v383 = vld [vmem:[#allocation5 + $0x48c] sm:$0xf]
    %v384 = vld [vmem:[#allocation5 + $0x490] sm:$0xf]
    %v385 = vld [vmem:[#allocation5 + $0x494] sm:$0xf]
    %v386 = vld [vmem:[#allocation5 + $0x498] sm:$0xf]
    %v387 = vld [vmem:[#allocation5 + $0x49c] sm:$0xf]
    %v388 = vld [vmem:[#allocation5 + $0x4a0] sm:$0xf]
    %v389 = vld [vmem:[#allocation5 + $0x4a4] sm:$0xf]
    %v390 = vld [vmem:[#allocation5 + $0x4a8] sm:$0xf]
    %v391 = vld [vmem:[#allocation5 + $0x4ac] sm:$0xf]
    %v392 = vld [vmem:[#allocation5 + $0x4b0] sm:$0xf]
    %v393 = vld [vmem:[#allocation5 + $0x4b4] sm:$0xf]
    %v394 = vld [vmem:[#allocation5 + $0x4b8] sm:$0xf]
    %v395 = vld [vmem:[#allocation5 + $0x4bc] sm:$0xf]
    %v396 = vld [vmem:[#allocation5 + $0x4c0] sm:$0xf]
    %v397 = vld [vmem:[#allocation5 + $0x4c4] sm:$0xf]
    %v398 = vld [vmem:[#allocation5 + $0x4c8] sm:$0xf]
    %v399 = vld [vmem:[#allocation5 + $0x4cc] sm:$0xf]
    %v400 = vld [vmem:[#allocation5 + $0x4d0] sm:$0xf]
    %v401 = vld [vmem:[#allocation5 + $0x4d4] sm:$0xf]
    %v402 = vld [vmem:[#allocation5 + $0x4d8] sm:$0xf]
    %v403 = vld [vmem:[#allocation5 + $0x4dc] sm:$0xf]
    %v404 = vld [vmem:[#allocation5 + $0x4e0] sm:$0xf]
    %v405 = vld [vmem:[#allocation5 + $0x4e4] sm:$0xf]
    %v406 = vld [vmem:[#allocation5 + $0x4e8] sm:$0xf]
    %v407 = vld [vmem:[#allocation5 + $0x4ec] sm:$0xf]
    %v408 = vld [vmem:[#allocation5 + $0x4f0] sm:$0xf]
    %v409 = vld [vmem:[#allocation5 + $0x4f4] sm:$0xf]
    %v410 = vld [vmem:[#allocation5 + $0x4f8] sm:$0xf]
    %v411 = vld [vmem:[#allocation5 + $0x4fc] sm:$0xf]
    %v412 = vld [vmem:[#allocation5 + $0x500] sm:$0xf]
    %v413 = vld [vmem:[#allocation5 + $0x504] sm:$0xf]
    %v414 = vld [vmem:[#allocation5 + $0x508] sm:$0xf]
    %v415 = vld [vmem:[#allocation5 + $0x50c] sm:$0xf]
    %v416 = vld [vmem:[#allocation5 + $0x510] sm:$0xf]
    %v417 = vld [vmem:[#allocation5 + $0x514] sm:$0xf]
    %v418 = vld [vmem:[#allocation5 + $0x518] sm:$0xf]
    %v419 = vld [vmem:[#allocation5 + $0x51c] sm:$0xf]
    %v420 = vld [vmem:[#allocation5 + $0x520] sm:$0xf]
    %v421 = vld [vmem:[#allocation5 + $0x524] sm:$0xf]
    %v422 = vld [vmem:[#allocation5 + $0x528] sm:$0xf]
    %v423 = vld [vmem:[#allocation5 + $0x52c] sm:$0xf]
    %v424 = vld [vmem:[#allocation5 + $0x530] sm:$0xf]
    %v425 = vld [vmem:[#allocation5 + $0x534] sm:$0xf]
    %v426 = vld [vmem:[#allocation5 + $0x538] sm:$0xf]
    %v427 = vld [vmem:[#allocation5 + $0x53c] sm:$0xf]
    %v428 = vld [vmem:[#allocation5 + $0x540] sm:$0xf]
    %v429 = vld [vmem:[#allocation5 + $0x544] sm:$0xf]
    %v430 = vld [vmem:[#allocation5 + $0x548] sm:$0xf]
    %v431 = vld [vmem:[#allocation5 + $0x54c] sm:$0xf]
    %v432 = vld [vmem:[#allocation5 + $0x550] sm:$0xf]
    %v433 = vld [vmem:[#allocation5 + $0x554] sm:$0xf]
    %v434 = vld [vmem:[#allocation5 + $0x558] sm:$0xf]
    %v435 = vld [vmem:[#allocation5 + $0x55c] sm:$0xf]
    %v436 = vld [vmem:[#allocation5 + $0x560] sm:$0xf]
    %v437 = vld [vmem:[#allocation5 + $0x564] sm:$0xf]
    %v438 = vld [vmem:[#allocation5 + $0x568] sm:$0xf]
    %v439 = vld [vmem:[#allocation5 + $0x56c] sm:$0xf]
    %v440 = vld [vmem:[#allocation5 + $0x570] sm:$0xf]
    %v441 = vld [vmem:[#allocation5 + $0x574] sm:$0xf]
    %v442 = vld [vmem:[#allocation5 + $0x578] sm:$0xf]
    %v443 = vld [vmem:[#allocation5 + $0x57c] sm:$0xf]
    %v444 = vld [vmem:[#allocation5 + $0x580] sm:$0xf]
    %v445 = vld [vmem:[#allocation5 + $0x584] sm:$0xf]
    %v446 = vld [vmem:[#allocation5 + $0x588] sm:$0xf]
    %v447 = vld [vmem:[#allocation5 + $0x58c] sm:$0xf]
    %v448 = vld [vmem:[#allocation5 + $0x590] sm:$0xf]
    %v449 = vld [vmem:[#allocation5 + $0x594] sm:$0xf]
    %v450 = vld [vmem:[#allocation5 + $0x598] sm:$0xf]
    %v451 = vld [vmem:[#allocation5 + $0x59c] sm:$0xf]
    %v452 = vld [vmem:[#allocation5 + $0x5a0] sm:$0xf]
    %v453 = vld [vmem:[#allocation5 + $0x5a4] sm:$0xf]
    %v454 = vld [vmem:[#allocation5 + $0x5a8] sm:$0xf]
    %v455 = vld [vmem:[#allocation5 + $0x5ac] sm:$0xf]
    %v456 = vld [vmem:[#allocation5 + $0x5b0] sm:$0xf]
    %v457 = vld [vmem:[#allocation5 + $0x5b4] sm:$0xf]
    %v458 = vld [vmem:[#allocation5 + $0x5b8] sm:$0xf]
    %v459 = vld [vmem:[#allocation5 + $0x5bc] sm:$0xf]
    %v460 = vld [vmem:[#allocation5 + $0x5c0] sm:$0xf]
    %v461 = vld [vmem:[#allocation5 + $0x5c4] sm:$0xf]
    %v462 = vld [vmem:[#allocation5 + $0x5c8] sm:$0xf]
    %v463 = vld [vmem:[#allocation5 + $0x5cc] sm:$0xf]
    %v464 = vld [vmem:[#allocation5 + $0x5d0] sm:$0xf]
    %v465 = vld [vmem:[#allocation5 + $0x5d4] sm:$0xf]
    %v466 = vld [vmem:[#allocation5 + $0x5d8] sm:$0xf]
    %v467 = vld [vmem:[#allocation5 + $0x5dc] sm:$0xf]
    %v468 = vld [vmem:[#allocation5 + $0x5e0] sm:$0xf]
    %v469 = vld [vmem:[#allocation5 + $0x5e4] sm:$0xf]
    %v470 = vld [vmem:[#allocation5 + $0x5e8] sm:$0xf]
    %v471 = vld [vmem:[#allocation5 + $0x5ec] sm:$0xf]
    %v472 = vld [vmem:[#allocation5 + $0x5f0] sm:$0xf]
    %v473 = vld [vmem:[#allocation5 + $0x5f4] sm:$0xf]
    %v474 = vld [vmem:[#allocation5 + $0x5f8] sm:$0xf]
    %v475 = vld [vmem:[#allocation5 + $0x5fc] sm:$0xf]
    %v476 = vld [vmem:[%s2] sm:$0x1]
    %v478 = vperm.slane %v476, 0
    %v504 = vunpack.c.l.b16 %v68
    %v505 = vunpack.c.h.b16 %v68
    %v506 = vunpack.c.l.b16 %v69
    %v507 = vunpack.c.h.b16 %v69
    %v508 = vunpack.c.l.b16 %v70
    %v509 = vunpack.c.h.b16 %v70
    %v510 = vunpack.c.l.b16 %v71
    %v511 = vunpack.c.h.b16 %v71
    %v512 = vunpack.c.l.b16 %v72
    %v513 = vunpack.c.h.b16 %v72
    %v514 = vunpack.c.l.b16 %v73
    %v515 = vunpack.c.h.b16 %v73
    %v516 = vunpack.c.l.b16 %v74
    %v517 = vunpack.c.h.b16 %v74
    %v518 = vunpack.c.l.b16 %v75
    %v519 = vunpack.c.h.b16 %v75
    %v520 = vunpack.c.l.b16 %v76
    %v521 = vunpack.c.h.b16 %v76
    %v522 = vunpack.c.l.b16 %v77
    %v523 = vunpack.c.h.b16 %v77
    %v524 = vunpack.c.l.b16 %v78
    %v525 = vunpack.c.h.b16 %v78
    %v526 = vunpack.c.l.b16 %v79
    %v527 = vunpack.c.h.b16 %v79
    %v528 = vunpack.c.l.b16 %v80
    %v529 = vunpack.c.h.b16 %v80
    %v530 = vunpack.c.l.b16 %v81
    %v531 = vunpack.c.h.b16 %v81
    %v532 = vunpack.c.l.b16 %v82
    %v533 = vunpack.c.h.b16 %v82
    %v534 = vunpack.c.l.b16 %v83
    %v535 = vunpack.c.h.b16 %v83
    %v536 = vunpack.c.l.b16 %v84
    %v537 = vunpack.c.h.b16 %v84
    %v538 = vunpack.c.l.b16 %v85
    %v539 = vunpack.c.h.b16 %v85
    %v540 = vunpack.c.l.b16 %v86
    %v541 = vunpack.c.h.b16 %v86
    %v542 = vunpack.c.l.b16 %v87
    %v543 = vunpack.c.h.b16 %v87
    %v544 = vunpack.c.l.b16 %v88
    %v545 = vunpack.c.h.b16 %v88
    %v546 = vunpack.c.l.b16 %v89
    %v547 = vunpack.c.h.b16 %v89
    %v548 = vunpack.c.l.b16 %v90
    %v549 = vunpack.c.h.b16 %v90
    %v550 = vunpack.c.l.b16 %v91
    %v551 = vunpack.c.h.b16 %v91
    %v552 = vpack.c.b16 %v528, %v504
    %v553 = vpack.c.b16 %v529, %v505
    %v554 = vpack.c.b16 %v530, %v506
    %v555 = vpack.c.b16 %v531, %v507
    %v556 = vpack.c.b16 %v532, %v508
    %v557 = vpack.c.b16 %v533, %v509
    %v558 = vpack.c.b16 %v534, %v510
    %v559 = vpack.c.b16 %v535, %v511
    %v560 = vpack.c.b16 %v536, %v512
    %v561 = vpack.c.b16 %v537, %v513
    %v562 = vpack.c.b16 %v538, %v514
    %v563 = vpack.c.b16 %v539, %v515
    %v564 = vpack.c.b16 %v540, %v516
    %v565 = vpack.c.b16 %v541, %v517
    %v566 = vpack.c.b16 %v542, %v518
    %v567 = vpack.c.b16 %v543, %v519
    %v568 = vpack.c.b16 %v544, %v520
    %v569 = vpack.c.b16 %v545, %v521
    %v570 = vpack.c.b16 %v546, %v522
    %v571 = vpack.c.b16 %v547, %v523
    %v572 = vpack.c.b16 %v548, %v524
    %v573 = vpack.c.b16 %v549, %v525
    %v574 = vpack.c.b16 %v550, %v526
    %v575 = vpack.c.b16 %v551, %v527
    %v984 = vunpack.c.l.b16 %v92
    %v985 = vunpack.c.l.b16 %v93
    %v986 = vunpack.c.l.b16 %v94
    %v987 = vunpack.c.l.b16 %v95
    %v988 = vunpack.c.l.b16 %v96
    %v989 = vunpack.c.l.b16 %v97
    %v990 = vunpack.c.l.b16 %v98
    %v991 = vunpack.c.l.b16 %v99
    %v992 = vunpack.c.l.b16 %v100
    %v993 = vunpack.c.l.b16 %v101
    %v994 = vunpack.c.l.b16 %v102
    %v995 = vunpack.c.l.b16 %v103
    %v996 = vunpack.c.l.b16 %v104
    %v997 = vunpack.c.l.b16 %v105
    %v998 = vunpack.c.l.b16 %v106
    %v999 = vunpack.c.l.b16 %v107
    %v1000 = vunpack.c.l.b16 %v108
    %v1001 = vunpack.c.l.b16 %v109
    %v1002 = vunpack.c.l.b16 %v110
    %v1003 = vunpack.c.l.b16 %v111
    %v1004 = vunpack.c.l.b16 %v112
    %v1005 = vunpack.c.l.b16 %v113
    %v1006 = vunpack.c.l.b16 %v114
    %v1007 = vunpack.c.l.b16 %v115
    %v1008 = vunpack.c.l.b16 %v116
    %v1009 = vunpack.c.l.b16 %v117
    %v1010 = vunpack.c.l.b16 %v118
    %v1011 = vunpack.c.l.b16 %v119
    %v1012 = vunpack.c.l.b16 %v120
    %v1013 = vunpack.c.l.b16 %v121
    %v1014 = vunpack.c.l.b16 %v122
    %v1015 = vunpack.c.l.b16 %v123
    %v1016 = vunpack.c.l.b16 %v124
    %v1017 = vunpack.c.l.b16 %v125
    %v1018 = vunpack.c.l.b16 %v126
    %v1019 = vunpack.c.l.b16 %v127
    %v1020 = vunpack.c.l.b16 %v128
    %v1021 = vunpack.c.l.b16 %v129
    %v1022 = vunpack.c.l.b16 %v130
    %v1023 = vunpack.c.l.b16 %v131
    %v1024 = vunpack.c.l.b16 %v132
    %v1025 = vunpack.c.l.b16 %v133
    %v1026 = vunpack.c.l.b16 %v134
    %v1027 = vunpack.c.l.b16 %v135
    %v1028 = vunpack.c.l.b16 %v136
    %v1029 = vunpack.c.l.b16 %v137
    %v1030 = vunpack.c.l.b16 %v138
    %v1031 = vunpack.c.l.b16 %v139
    %v1032 = vunpack.c.l.b16 %v140
    %v1033 = vunpack.c.l.b16 %v141
    %v1034 = vunpack.c.l.b16 %v142
    %v1035 = vunpack.c.l.b16 %v143
    %v1036 = vunpack.c.l.b16 %v144
    %v1037 = vunpack.c.l.b16 %v145
    %v1038 = vunpack.c.l.b16 %v146
    %v1039 = vunpack.c.l.b16 %v147
    %v1040 = vunpack.c.l.b16 %v148
    %v1041 = vunpack.c.l.b16 %v149
    %v1042 = vunpack.c.l.b16 %v150
    %v1043 = vunpack.c.l.b16 %v151
    %v1044 = vunpack.c.l.b16 %v152
    %v1045 = vunpack.c.l.b16 %v153
    %v1046 = vunpack.c.l.b16 %v154
    %v1047 = vunpack.c.l.b16 %v155
    %v1048 = vunpack.c.l.b16 %v156
    %v1049 = vunpack.c.l.b16 %v157
    %v1050 = vunpack.c.l.b16 %v158
    %v1051 = vunpack.c.l.b16 %v159
    %v1052 = vunpack.c.l.b16 %v160
    %v1053 = vunpack.c.l.b16 %v161
    %v1054 = vunpack.c.l.b16 %v162
    %v1055 = vunpack.c.l.b16 %v163
    %v1056 = vunpack.c.l.b16 %v164
    %v1057 = vunpack.c.l.b16 %v165
    %v1058 = vunpack.c.l.b16 %v166
    %v1059 = vunpack.c.l.b16 %v167
    %v1060 = vunpack.c.l.b16 %v168
    %v1061 = vunpack.c.l.b16 %v169
    %v1062 = vunpack.c.l.b16 %v170
    %v1063 = vunpack.c.l.b16 %v171
    %v1064 = vunpack.c.l.b16 %v172
    %v1065 = vunpack.c.l.b16 %v173
    %v1066 = vunpack.c.l.b16 %v174
    %v1067 = vunpack.c.l.b16 %v175
    %v1068 = vunpack.c.l.b16 %v176
    %v1069 = vunpack.c.l.b16 %v177
    %v1070 = vunpack.c.l.b16 %v178
    %v1071 = vunpack.c.l.b16 %v179
    %v1072 = vunpack.c.l.b16 %v180
    %v1073 = vunpack.c.l.b16 %v181
    %v1074 = vunpack.c.l.b16 %v182
    %v1075 = vunpack.c.l.b16 %v183
    %v1076 = vunpack.c.l.b16 %v184
    %v1077 = vunpack.c.l.b16 %v185
    %v1078 = vunpack.c.l.b16 %v186
    %v1079 = vunpack.c.l.b16 %v187
    %v1080 = vunpack.c.l.b16 %v188
    %v1081 = vunpack.c.l.b16 %v189
    %v1082 = vunpack.c.l.b16 %v190
    %v1083 = vunpack.c.l.b16 %v191
    %v1084 = vunpack.c.l.b16 %v192
    %v1085 = vunpack.c.l.b16 %v193
    %v1086 = vunpack.c.l.b16 %v194
    %v1087 = vunpack.c.l.b16 %v195
    %v1088 = vunpack.c.l.b16 %v196
    %v1089 = vunpack.c.l.b16 %v197
    %v1090 = vunpack.c.l.b16 %v198
    %v1091 = vunpack.c.l.b16 %v199
    %v1092 = vunpack.c.l.b16 %v200
    %v1093 = vunpack.c.l.b16 %v201
    %v1094 = vunpack.c.l.b16 %v202
    %v1095 = vunpack.c.l.b16 %v203
    %v1096 = vunpack.c.l.b16 %v204
    %v1097 = vunpack.c.l.b16 %v205
    %v1098 = vunpack.c.l.b16 %v206
    %v1099 = vunpack.c.l.b16 %v207
    %v1100 = vunpack.c.l.b16 %v208
    %v1101 = vunpack.c.l.b16 %v209
    %v1102 = vunpack.c.l.b16 %v210
    %v1103 = vunpack.c.l.b16 %v211
    %v1104 = vunpack.c.l.b16 %v212
    %v1105 = vunpack.c.l.b16 %v213
    %v1106 = vunpack.c.l.b16 %v214
    %v1107 = vunpack.c.l.b16 %v215
    %v1108 = vunpack.c.l.b16 %v216
    %v1109 = vunpack.c.l.b16 %v217
    %v1110 = vunpack.c.l.b16 %v218
    %v1111 = vunpack.c.l.b16 %v219
    %v1112 = vunpack.c.l.b16 %v220
    %v1113 = vunpack.c.l.b16 %v221
    %v1114 = vunpack.c.l.b16 %v222
    %v1115 = vunpack.c.l.b16 %v223
    %v1116 = vunpack.c.l.b16 %v224
    %v1117 = vunpack.c.l.b16 %v225
    %v1118 = vunpack.c.l.b16 %v226
    %v1119 = vunpack.c.l.b16 %v227
    %v1120 = vunpack.c.l.b16 %v228
    %v1121 = vunpack.c.l.b16 %v229
    %v1122 = vunpack.c.l.b16 %v230
    %v1123 = vunpack.c.l.b16 %v231
    %v1124 = vunpack.c.l.b16 %v232
    %v1125 = vunpack.c.l.b16 %v233
    %v1126 = vunpack.c.l.b16 %v234
    %v1127 = vunpack.c.l.b16 %v235
    %v1128 = vunpack.c.l.b16 %v236
    %v1129 = vunpack.c.l.b16 %v237
    %v1130 = vunpack.c.l.b16 %v238
    %v1131 = vunpack.c.l.b16 %v239
    %v1132 = vunpack.c.l.b16 %v240
    %v1133 = vunpack.c.l.b16 %v241
    %v1134 = vunpack.c.l.b16 %v242
    %v1135 = vunpack.c.l.b16 %v243
    %v1136 = vunpack.c.l.b16 %v244
    %v1137 = vunpack.c.l.b16 %v245
    %v1138 = vunpack.c.l.b16 %v246
    %v1139 = vunpack.c.l.b16 %v247
    %v1140 = vunpack.c.l.b16 %v248
    %v1141 = vunpack.c.l.b16 %v249
    %v1142 = vunpack.c.l.b16 %v250
    %v1143 = vunpack.c.l.b16 %v251
    %v1144 = vunpack.c.l.b16 %v252
    %v1145 = vunpack.c.l.b16 %v253
    %v1146 = vunpack.c.l.b16 %v254
    %v1147 = vunpack.c.l.b16 %v255
    %v1148 = vunpack.c.l.b16 %v256
    %v1149 = vunpack.c.l.b16 %v257
    %v1150 = vunpack.c.l.b16 %v258
    %v1151 = vunpack.c.l.b16 %v259
    %v1152 = vunpack.c.l.b16 %v260
    %v1153 = vunpack.c.l.b16 %v261
    %v1154 = vunpack.c.l.b16 %v262
    %v1155 = vunpack.c.l.b16 %v263
    %v1156 = vunpack.c.l.b16 %v264
    %v1157 = vunpack.c.l.b16 %v265
    %v1158 = vunpack.c.l.b16 %v266
    %v1159 = vunpack.c.l.b16 %v267
    %v1160 = vunpack.c.l.b16 %v268
    %v1161 = vunpack.c.l.b16 %v269
    %v1162 = vunpack.c.l.b16 %v270
    %v1163 = vunpack.c.l.b16 %v271
    %v1164 = vunpack.c.l.b16 %v272
    %v1165 = vunpack.c.l.b16 %v273
    %v1166 = vunpack.c.l.b16 %v274
    %v1167 = vunpack.c.l.b16 %v275
    %v1168 = vunpack.c.l.b16 %v276
    %v1169 = vunpack.c.l.b16 %v277
    %v1170 = vunpack.c.l.b16 %v278
    %v1171 = vunpack.c.l.b16 %v279
    %v1172 = vunpack.c.l.b16 %v280
    %v1173 = vunpack.c.l.b16 %v281
    %v1174 = vunpack.c.l.b16 %v282
    %v1175 = vunpack.c.l.b16 %v283
    %v1176 = vunpack.c.l.b16 %v284
    %v1177 = vunpack.c.l.b16 %v285
    %v1178 = vunpack.c.l.b16 %v286
    %v1179 = vunpack.c.l.b16 %v287
    %v1180 = vunpack.c.l.b16 %v288
    %v1181 = vunpack.c.l.b16 %v289
    %v1182 = vunpack.c.l.b16 %v290
    %v1183 = vunpack.c.l.b16 %v291
    %v1184 = vunpack.c.l.b16 %v292
    %v1185 = vunpack.c.l.b16 %v293
    %v1186 = vunpack.c.l.b16 %v294
    %v1187 = vunpack.c.l.b16 %v295
    %v1188 = vunpack.c.l.b16 %v296
    %v1189 = vunpack.c.l.b16 %v297
    %v1190 = vunpack.c.l.b16 %v298
    %v1191 = vunpack.c.l.b16 %v299
    %v1192 = vunpack.c.l.b16 %v300
    %v1193 = vunpack.c.l.b16 %v301
    %v1194 = vunpack.c.l.b16 %v302
    %v1195 = vunpack.c.l.b16 %v303
    %v1196 = vunpack.c.l.b16 %v304
    %v1197 = vunpack.c.l.b16 %v305
    %v1198 = vunpack.c.l.b16 %v306
    %v1199 = vunpack.c.l.b16 %v307
    %v1200 = vunpack.c.l.b16 %v308
    %v1201 = vunpack.c.l.b16 %v309
    %v1202 = vunpack.c.l.b16 %v310
    %v1203 = vunpack.c.l.b16 %v311
    %v1204 = vunpack.c.l.b16 %v312
    %v1205 = vunpack.c.l.b16 %v313
    %v1206 = vunpack.c.l.b16 %v314
    %v1207 = vunpack.c.l.b16 %v315
    %v1208 = vunpack.c.l.b16 %v316
    %v1209 = vunpack.c.l.b16 %v317
    %v1210 = vunpack.c.l.b16 %v318
    %v1211 = vunpack.c.l.b16 %v319
    %v1212 = vunpack.c.l.b16 %v320
    %v1213 = vunpack.c.l.b16 %v321
    %v1214 = vunpack.c.l.b16 %v322
    %v1215 = vunpack.c.l.b16 %v323
    %v1216 = vunpack.c.l.b16 %v324
    %v1217 = vunpack.c.l.b16 %v325
    %v1218 = vunpack.c.l.b16 %v326
    %v1219 = vunpack.c.l.b16 %v327
    %v1220 = vunpack.c.l.b16 %v328
    %v1221 = vunpack.c.l.b16 %v329
    %v1222 = vunpack.c.l.b16 %v330
    %v1223 = vunpack.c.l.b16 %v331
    %v1224 = vunpack.c.l.b16 %v332
    %v1225 = vunpack.c.l.b16 %v333
    %v1226 = vunpack.c.l.b16 %v334
    %v1227 = vunpack.c.l.b16 %v335
    %v1228 = vunpack.c.l.b16 %v336
    %v1229 = vunpack.c.l.b16 %v337
    %v1230 = vunpack.c.l.b16 %v338
    %v1231 = vunpack.c.l.b16 %v339
    %v1232 = vunpack.c.l.b16 %v340
    %v1233 = vunpack.c.l.b16 %v341
    %v1234 = vunpack.c.l.b16 %v342
    %v1235 = vunpack.c.l.b16 %v343
    %v1236 = vunpack.c.l.b16 %v344
    %v1237 = vunpack.c.l.b16 %v345
    %v1238 = vunpack.c.l.b16 %v346
    %v1239 = vunpack.c.l.b16 %v347
    %v1240 = vunpack.c.l.b16 %v348
    %v1241 = vunpack.c.l.b16 %v349
    %v1242 = vunpack.c.l.b16 %v350
    %v1243 = vunpack.c.l.b16 %v351
    %v1244 = vunpack.c.l.b16 %v352
    %v1245 = vunpack.c.l.b16 %v353
    %v1246 = vunpack.c.l.b16 %v354
    %v1247 = vunpack.c.l.b16 %v355
    %v1248 = vunpack.c.l.b16 %v356
    %v1249 = vunpack.c.l.b16 %v357
    %v1250 = vunpack.c.l.b16 %v358
    %v1251 = vunpack.c.l.b16 %v359
    %v1252 = vunpack.c.l.b16 %v360
    %v1253 = vunpack.c.l.b16 %v361
    %v1254 = vunpack.c.l.b16 %v362
    %v1255 = vunpack.c.l.b16 %v363
    %v1256 = vunpack.c.l.b16 %v364
    %v1257 = vunpack.c.l.b16 %v365
    %v1258 = vunpack.c.l.b16 %v366
    %v1259 = vunpack.c.l.b16 %v367
    %v1260 = vunpack.c.l.b16 %v368
    %v1261 = vunpack.c.l.b16 %v369
    %v1262 = vunpack.c.l.b16 %v370
    %v1263 = vunpack.c.l.b16 %v371
    %v1264 = vunpack.c.l.b16 %v372
    %v1265 = vunpack.c.l.b16 %v373
    %v1266 = vunpack.c.l.b16 %v374
    %v1267 = vunpack.c.l.b16 %v375
    %v1268 = vunpack.c.l.b16 %v376
    %v1269 = vunpack.c.l.b16 %v377
    %v1270 = vunpack.c.l.b16 %v378
    %v1271 = vunpack.c.l.b16 %v379
    %v1272 = vunpack.c.l.b16 %v380
    %v1273 = vunpack.c.l.b16 %v381
    %v1274 = vunpack.c.l.b16 %v382
    %v1275 = vunpack.c.l.b16 %v383
    %v1276 = vunpack.c.l.b16 %v384
    %v1277 = vunpack.c.l.b16 %v385
    %v1278 = vunpack.c.l.b16 %v386
    %v1279 = vunpack.c.l.b16 %v387
    %v1280 = vunpack.c.l.b16 %v388
    %v1281 = vunpack.c.l.b16 %v389
    %v1282 = vunpack.c.l.b16 %v390
    %v1283 = vunpack.c.l.b16 %v391
    %v1284 = vunpack.c.l.b16 %v392
    %v1285 = vunpack.c.l.b16 %v393
    %v1286 = vunpack.c.l.b16 %v394
    %v1287 = vunpack.c.l.b16 %v395
    %v1288 = vunpack.c.l.b16 %v396
    %v1289 = vunpack.c.l.b16 %v397
    %v1290 = vunpack.c.l.b16 %v398
    %v1291 = vunpack.c.l.b16 %v399
    %v1292 = vunpack.c.l.b16 %v400
    %v1293 = vunpack.c.l.b16 %v401
    %v1294 = vunpack.c.l.b16 %v402
    %v1295 = vunpack.c.l.b16 %v403
    %v1296 = vunpack.c.l.b16 %v404
    %v1297 = vunpack.c.l.b16 %v405
    %v1298 = vunpack.c.l.b16 %v406
    %v1299 = vunpack.c.l.b16 %v407
    %v1300 = vunpack.c.l.b16 %v408
    %v1301 = vunpack.c.l.b16 %v409
    %v1302 = vunpack.c.l.b16 %v410
    %v1303 = vunpack.c.l.b16 %v411
    %v1304 = vunpack.c.l.b16 %v412
    %v1305 = vunpack.c.l.b16 %v413
    %v1306 = vunpack.c.l.b16 %v414
    %v1307 = vunpack.c.l.b16 %v415
    %v1308 = vunpack.c.l.b16 %v416
    %v1309 = vunpack.c.l.b16 %v417
    %v1310 = vunpack.c.l.b16 %v418
    %v1311 = vunpack.c.l.b16 %v419
    %v1312 = vunpack.c.l.b16 %v420
    %v1313 = vunpack.c.l.b16 %v421
    %v1314 = vunpack.c.l.b16 %v422
    %v1315 = vunpack.c.l.b16 %v423
    %v1316 = vunpack.c.l.b16 %v424
    %v1317 = vunpack.c.l.b16 %v425
    %v1318 = vunpack.c.l.b16 %v426
    %v1319 = vunpack.c.l.b16 %v427
    %v1320 = vunpack.c.l.b16 %v428
    %v1321 = vunpack.c.l.b16 %v429
    %v1322 = vunpack.c.l.b16 %v430
    %v1323 = vunpack.c.l.b16 %v431
    %v1324 = vunpack.c.l.b16 %v432
    %v1325 = vunpack.c.l.b16 %v433
    %v1326 = vunpack.c.l.b16 %v434
    %v1327 = vunpack.c.l.b16 %v435
    %v1328 = vunpack.c.l.b16 %v436
    %v1329 = vunpack.c.l.b16 %v437
    %v1330 = vunpack.c.l.b16 %v438
    %v1331 = vunpack.c.l.b16 %v439
    %v1332 = vunpack.c.l.b16 %v440
    %v1333 = vunpack.c.l.b16 %v441
    %v1334 = vunpack.c.l.b16 %v442
    %v1335 = vunpack.c.l.b16 %v443
    %v1336 = vunpack.c.l.b16 %v444
    %v1337 = vunpack.c.l.b16 %v445
    %v1338 = vunpack.c.l.b16 %v446
    %v1339 = vunpack.c.l.b16 %v447
    %v1340 = vunpack.c.l.b16 %v448
    %v1341 = vunpack.c.l.b16 %v449
    %v1342 = vunpack.c.l.b16 %v450
    %v1343 = vunpack.c.l.b16 %v451
    %v1344 = vunpack.c.l.b16 %v452
    %v1345 = vunpack.c.l.b16 %v453
    %v1346 = vunpack.c.l.b16 %v454
    %v1347 = vunpack.c.l.b16 %v455
    %v1348 = vunpack.c.l.b16 %v456
    %v1349 = vunpack.c.l.b16 %v457
    %v1350 = vunpack.c.l.b16 %v458
    %v1351 = vunpack.c.l.b16 %v459
    %v1352 = vunpack.c.l.b16 %v460
    %v1353 = vunpack.c.l.b16 %v461
    %v1354 = vunpack.c.l.b16 %v462
    %v1355 = vunpack.c.l.b16 %v463
    %v1356 = vunpack.c.l.b16 %v464
    %v1357 = vunpack.c.l.b16 %v465
    %v1358 = vunpack.c.l.b16 %v466
    %v1359 = vunpack.c.l.b16 %v467
    %v1360 = vunpack.c.l.b16 %v468
    %v1361 = vunpack.c.l.b16 %v469
    %v1362 = vunpack.c.l.b16 %v470
    %v1363 = vunpack.c.l.b16 %v471
    %v1364 = vunpack.c.l.b16 %v472
    %v1365 = vunpack.c.l.b16 %v473
    %v1366 = vunpack.c.l.b16 %v474
    %v1367 = vunpack.c.l.b16 %v475
    %v1368 = vpack.c.b16 %v985, %v984
    %v1369 = vpack.c.b16 %v987, %v986
    %v1370 = vpack.c.b16 %v989, %v988
    %v1371 = vpack.c.b16 %v991, %v990
    %v1372 = vpack.c.b16 %v993, %v992
    %v1373 = vpack.c.b16 %v995, %v994
    %v1374 = vpack.c.b16 %v997, %v996
    %v1375 = vpack.c.b16 %v999, %v998
    %v1376 = vpack.c.b16 %v1001, %v1000
    %v1377 = vpack.c.b16 %v1003, %v1002
    %v1378 = vpack.c.b16 %v1005, %v1004
    %v1379 = vpack.c.b16 %v1007, %v1006
    %v1380 = vpack.c.b16 %v1009, %v1008
    %v1381 = vpack.c.b16 %v1011, %v1010
    %v1382 = vpack.c.b16 %v1013, %v1012
    %v1383 = vpack.c.b16 %v1015, %v1014
    %v1384 = vpack.c.b16 %v1017, %v1016
    %v1385 = vpack.c.b16 %v1019, %v1018
    %v1386 = vpack.c.b16 %v1021, %v1020
    %v1387 = vpack.c.b16 %v1023, %v1022
    %v1388 = vpack.c.b16 %v1025, %v1024
    %v1389 = vpack.c.b16 %v1027, %v1026
    %v1390 = vpack.c.b16 %v1029, %v1028
    %v1391 = vpack.c.b16 %v1031, %v1030
    %v1392 = vpack.c.b16 %v1033, %v1032
    %v1393 = vpack.c.b16 %v1035, %v1034
    %v1394 = vpack.c.b16 %v1037, %v1036
    %v1395 = vpack.c.b16 %v1039, %v1038
    %v1396 = vpack.c.b16 %v1041, %v1040
    %v1397 = vpack.c.b16 %v1043, %v1042
    %v1398 = vpack.c.b16 %v1045, %v1044
    %v1399 = vpack.c.b16 %v1047, %v1046
    %v1400 = vpack.c.b16 %v1049, %v1048
    %v1401 = vpack.c.b16 %v1051, %v1050
    %v1402 = vpack.c.b16 %v1053, %v1052
    %v1403 = vpack.c.b16 %v1055, %v1054
    %v1404 = vpack.c.b16 %v1057, %v1056
    %v1405 = vpack.c.b16 %v1059, %v1058
    %v1406 = vpack.c.b16 %v1061, %v1060
    %v1407 = vpack.c.b16 %v1063, %v1062
    %v1408 = vpack.c.b16 %v1065, %v1064
    %v1409 = vpack.c.b16 %v1067, %v1066
    %v1410 = vpack.c.b16 %v1069, %v1068
    %v1411 = vpack.c.b16 %v1071, %v1070
    %v1412 = vpack.c.b16 %v1073, %v1072
    %v1413 = vpack.c.b16 %v1075, %v1074
    %v1414 = vpack.c.b16 %v1077, %v1076
    %v1415 = vpack.c.b16 %v1079, %v1078
    %v1416 = vpack.c.b16 %v1081, %v1080
    %v1417 = vpack.c.b16 %v1083, %v1082
    %v1418 = vpack.c.b16 %v1085, %v1084
    %v1419 = vpack.c.b16 %v1087, %v1086
    %v1420 = vpack.c.b16 %v1089, %v1088
    %v1421 = vpack.c.b16 %v1091, %v1090
    %v1422 = vpack.c.b16 %v1093, %v1092
    %v1423 = vpack.c.b16 %v1095, %v1094
    %v1424 = vpack.c.b16 %v1097, %v1096
    %v1425 = vpack.c.b16 %v1099, %v1098
    %v1426 = vpack.c.b16 %v1101, %v1100
    %v1427 = vpack.c.b16 %v1103, %v1102
    %v1428 = vpack.c.b16 %v1105, %v1104
    %v1429 = vpack.c.b16 %v1107, %v1106
    %v1430 = vpack.c.b16 %v1109, %v1108
    %v1431 = vpack.c.b16 %v1111, %v1110
    %v1432 = vpack.c.b16 %v1113, %v1112
    %v1433 = vpack.c.b16 %v1115, %v1114
    %v1434 = vpack.c.b16 %v1117, %v1116
    %v1435 = vpack.c.b16 %v1119, %v1118
    %v1436 = vpack.c.b16 %v1121, %v1120
    %v1437 = vpack.c.b16 %v1123, %v1122
    %v1438 = vpack.c.b16 %v1125, %v1124
    %v1439 = vpack.c.b16 %v1127, %v1126
    %v1440 = vpack.c.b16 %v1129, %v1128
    %v1441 = vpack.c.b16 %v1131, %v1130
    %v1442 = vpack.c.b16 %v1133, %v1132
    %v1443 = vpack.c.b16 %v1135, %v1134
    %v1444 = vpack.c.b16 %v1137, %v1136
    %v1445 = vpack.c.b16 %v1139, %v1138
    %v1446 = vpack.c.b16 %v1141, %v1140
    %v1447 = vpack.c.b16 %v1143, %v1142
    %v1448 = vpack.c.b16 %v1145, %v1144
    %v1449 = vpack.c.b16 %v1147, %v1146
    %v1450 = vpack.c.b16 %v1149, %v1148
    %v1451 = vpack.c.b16 %v1151, %v1150
    %v1452 = vpack.c.b16 %v1153, %v1152
    %v1453 = vpack.c.b16 %v1155, %v1154
    %v1454 = vpack.c.b16 %v1157, %v1156
    %v1455 = vpack.c.b16 %v1159, %v1158
    %v1456 = vpack.c.b16 %v1161, %v1160
    %v1457 = vpack.c.b16 %v1163, %v1162
    %v1458 = vpack.c.b16 %v1165, %v1164
    %v1459 = vpack.c.b16 %v1167, %v1166
    %v1460 = vpack.c.b16 %v1169, %v1168
    %v1461 = vpack.c.b16 %v1171, %v1170
    %v1462 = vpack.c.b16 %v1173, %v1172
    %v1463 = vpack.c.b16 %v1175, %v1174
    %v1464 = vpack.c.b16 %v1177, %v1176
    %v1465 = vpack.c.b16 %v1179, %v1178
    %v1466 = vpack.c.b16 %v1181, %v1180
    %v1467 = vpack.c.b16 %v1183, %v1182
    %v1468 = vpack.c.b16 %v1185, %v1184
    %v1469 = vpack.c.b16 %v1187, %v1186
    %v1470 = vpack.c.b16 %v1189, %v1188
    %v1471 = vpack.c.b16 %v1191, %v1190
    %v1472 = vpack.c.b16 %v1193, %v1192
    %v1473 = vpack.c.b16 %v1195, %v1194
    %v1474 = vpack.c.b16 %v1197, %v1196
    %v1475 = vpack.c.b16 %v1199, %v1198
    %v1476 = vpack.c.b16 %v1201, %v1200
    %v1477 = vpack.c.b16 %v1203, %v1202
    %v1478 = vpack.c.b16 %v1205, %v1204
    %v1479 = vpack.c.b16 %v1207, %v1206
    %v1480 = vpack.c.b16 %v1209, %v1208
    %v1481 = vpack.c.b16 %v1211, %v1210
    %v1482 = vpack.c.b16 %v1213, %v1212
    %v1483 = vpack.c.b16 %v1215, %v1214
    %v1484 = vpack.c.b16 %v1217, %v1216
    %v1485 = vpack.c.b16 %v1219, %v1218
    %v1486 = vpack.c.b16 %v1221, %v1220
    %v1487 = vpack.c.b16 %v1223, %v1222
    %v1488 = vpack.c.b16 %v1225, %v1224
    %v1489 = vpack.c.b16 %v1227, %v1226
    %v1490 = vpack.c.b16 %v1229, %v1228
    %v1491 = vpack.c.b16 %v1231, %v1230
    %v1492 = vpack.c.b16 %v1233, %v1232
    %v1493 = vpack.c.b16 %v1235, %v1234
    %v1494 = vpack.c.b16 %v1237, %v1236
    %v1495 = vpack.c.b16 %v1239, %v1238
    %v1496 = vpack.c.b16 %v1241, %v1240
    %v1497 = vpack.c.b16 %v1243, %v1242
    %v1498 = vpack.c.b16 %v1245, %v1244
    %v1499 = vpack.c.b16 %v1247, %v1246
    %v1500 = vpack.c.b16 %v1249, %v1248
    %v1501 = vpack.c.b16 %v1251, %v1250
    %v1502 = vpack.c.b16 %v1253, %v1252
    %v1503 = vpack.c.b16 %v1255, %v1254
    %v1504 = vpack.c.b16 %v1257, %v1256
    %v1505 = vpack.c.b16 %v1259, %v1258
    %v1506 = vpack.c.b16 %v1261, %v1260
    %v1507 = vpack.c.b16 %v1263, %v1262
    %v1508 = vpack.c.b16 %v1265, %v1264
    %v1509 = vpack.c.b16 %v1267, %v1266
    %v1510 = vpack.c.b16 %v1269, %v1268
    %v1511 = vpack.c.b16 %v1271, %v1270
    %v1512 = vpack.c.b16 %v1273, %v1272
    %v1513 = vpack.c.b16 %v1275, %v1274
    %v1514 = vpack.c.b16 %v1277, %v1276
    %v1515 = vpack.c.b16 %v1279, %v1278
    %v1516 = vpack.c.b16 %v1281, %v1280
    %v1517 = vpack.c.b16 %v1283, %v1282
    %v1518 = vpack.c.b16 %v1285, %v1284
    %v1519 = vpack.c.b16 %v1287, %v1286
    %v1520 = vpack.c.b16 %v1289, %v1288
    %v1521 = vpack.c.b16 %v1291, %v1290
    %v1522 = vpack.c.b16 %v1293, %v1292
    %v1523 = vpack.c.b16 %v1295, %v1294
    %v1524 = vpack.c.b16 %v1297, %v1296
    %v1525 = vpack.c.b16 %v1299, %v1298
    %v1526 = vpack.c.b16 %v1301, %v1300
    %v1527 = vpack.c.b16 %v1303, %v1302
    %v1528 = vpack.c.b16 %v1305, %v1304
    %v1529 = vpack.c.b16 %v1307, %v1306
    %v1530 = vpack.c.b16 %v1309, %v1308
    %v1531 = vpack.c.b16 %v1311, %v1310
    %v1532 = vpack.c.b16 %v1313, %v1312
    %v1533 = vpack.c.b16 %v1315, %v1314
    %v1534 = vpack.c.b16 %v1317, %v1316
    %v1535 = vpack.c.b16 %v1319, %v1318
    %v1536 = vpack.c.b16 %v1321, %v1320
    %v1537 = vpack.c.b16 %v1323, %v1322
    %v1538 = vpack.c.b16 %v1325, %v1324
    %v1539 = vpack.c.b16 %v1327, %v1326
    %v1540 = vpack.c.b16 %v1329, %v1328
    %v1541 = vpack.c.b16 %v1331, %v1330
    %v1542 = vpack.c.b16 %v1333, %v1332
    %v1543 = vpack.c.b16 %v1335, %v1334
    %v1544 = vpack.c.b16 %v1337, %v1336
    %v1545 = vpack.c.b16 %v1339, %v1338
    %v1546 = vpack.c.b16 %v1341, %v1340
    %v1547 = vpack.c.b16 %v1343, %v1342
    %v1548 = vpack.c.b16 %v1345, %v1344
    %v1549 = vpack.c.b16 %v1347, %v1346
    %v1550 = vpack.c.b16 %v1349, %v1348
    %v1551 = vpack.c.b16 %v1351, %v1350
    %v1552 = vpack.c.b16 %v1353, %v1352
    %v1553 = vpack.c.b16 %v1355, %v1354
    %v1554 = vpack.c.b16 %v1357, %v1356
    %v1555 = vpack.c.b16 %v1359, %v1358
    %v1556 = vpack.c.b16 %v1361, %v1360
    %v1557 = vpack.c.b16 %v1363, %v1362
    %v1558 = vpack.c.b16 %v1365, %v1364
    %v1559 = vpack.c.b16 %v1367, %v1366
    %1752 = vmatpush.bf16.msra.mxu0 %v1375
    %1753 = vmatpush.bf16.msra.mxu0 %v1374
    %1754 = vmatpush.bf16.msra.mxu0 %v1373
    %1755 = vmatpush.bf16.msra.mxu0 %v1372
    %1756 = vmatpush.bf16.msra.mxu0 %v1371
    %1757 = vmatpush.bf16.msra.mxu0 %v1370
    %1758 = vmatpush.bf16.msra.mxu0 %v1369
    %1759 = vmatpush.bf16.msra.mxu0 %v1368
    %1760 = vmatmul.bf16.gmra.mxu0 %v552
    %v1761 = vpop.f32.mrf.mxu0
    %v1762 = vadd.f32 %v478, %v1761
    %v1763 = vpop.f32.mrf.mxu0
    %v1764 = vadd.f32 %v478, %v1763
    %1765 = vdwg.mxu0
    %1766 = vmatpush.bf16.msra.mxu0 %v1383
    %1767 = vmatpush.bf16.msra.mxu0 %v1382
    %1768 = vmatpush.bf16.msra.mxu0 %v1381
    %1769 = vmatpush.bf16.msra.mxu0 %v1380
    %1770 = vmatpush.bf16.msra.mxu0 %v1379
    %1771 = vmatpush.bf16.msra.mxu0 %v1378
    %1772 = vmatpush.bf16.msra.mxu0 %v1377
    %1773 = vmatpush.bf16.msra.mxu0 %v1376
    %1774 = vmatmul.bf16.gmra.mxu0 %v553
    %v1775 = vpop.f32.mrf.mxu0
    %v1776 = vadd.f32 %v1762, %v1775
    %v1777 = vpop.f32.mrf.mxu0
    %v1778 = vadd.f32 %v1764, %v1777
    %1779 = vdwg.mxu0
    %1780 = vmatpush.bf16.msra.mxu0 %v1391
    %1781 = vmatpush.bf16.msra.mxu0 %v1390
    %1782 = vmatpush.bf16.msra.mxu0 %v1389
    %1783 = vmatpush.bf16.msra.mxu0 %v1388
    %1784 = vmatpush.bf16.msra.mxu0 %v1387
    %1785 = vmatpush.bf16.msra.mxu0 %v1386
    %1786 = vmatpush.bf16.msra.mxu0 %v1385
    %1787 = vmatpush.bf16.msra.mxu0 %v1384
    %1788 = vmatmul.bf16.gmra.mxu0 %v554
    %v1789 = vpop.f32.mrf.mxu0
    %v1790 = vadd.f32 %v1776, %v1789
    %v1791 = vpop.f32.mrf.mxu0
    %v1792 = vadd.f32 %v1778, %v1791
    %1793 = vdwg.mxu0
    %1794 = vmatpush.bf16.msra.mxu0 %v1399
    %1795 = vmatpush.bf16.msra.mxu0 %v1398
    %1796 = vmatpush.bf16.msra.mxu0 %v1397
    %1797 = vmatpush.bf16.msra.mxu0 %v1396
    %1798 = vmatpush.bf16.msra.mxu0 %v1395
    %1799 = vmatpush.bf16.msra.mxu0 %v1394
    %1800 = vmatpush.bf16.msra.mxu0 %v1393
    %1801 = vmatpush.bf16.msra.mxu0 %v1392
    %1802 = vmatmul.bf16.gmra.mxu0 %v555
    %v1803 = vpop.f32.mrf.mxu0
    %v1804 = vadd.f32 %v1790, %v1803
    %v1805 = vpop.f32.mrf.mxu0
    %v1806 = vadd.f32 %v1792, %v1805
    %1807 = vdwg.mxu0
    %1808 = vmatpush.bf16.msra.mxu0 %v1407
    %1809 = vmatpush.bf16.msra.mxu0 %v1406
    %1810 = vmatpush.bf16.msra.mxu0 %v1405
    %1811 = vmatpush.bf16.msra.mxu0 %v1404
    %1812 = vmatpush.bf16.msra.mxu0 %v1403
    %1813 = vmatpush.bf16.msra.mxu0 %v1402
    %1814 = vmatpush.bf16.msra.mxu0 %v1401
    %1815 = vmatpush.bf16.msra.mxu0 %v1400
    %1816 = vmatmul.bf16.gmra.mxu0 %v556
    %v1817 = vpop.f32.mrf.mxu0
    %v1818 = vadd.f32 %v1804, %v1817
    %v1819 = vpop.f32.mrf.mxu0
    %v1820 = vadd.f32 %v1806, %v1819
    %1821 = vdwg.mxu0
    %1822 = vmatpush.bf16.msra.mxu0 %v1415
    %1823 = vmatpush.bf16.msra.mxu0 %v1414
    %1824 = vmatpush.bf16.msra.mxu0 %v1413
    %1825 = vmatpush.bf16.msra.mxu0 %v1412
    %1826 = vmatpush.bf16.msra.mxu0 %v1411
    %1827 = vmatpush.bf16.msra.mxu0 %v1410
    %1828 = vmatpush.bf16.msra.mxu0 %v1409
    %1829 = vmatpush.bf16.msra.mxu0 %v1408
    %1830 = vmatmul.bf16.gmra.mxu0 %v557
    %v1831 = vpop.f32.mrf.mxu0
    %v1832 = vadd.f32 %v1818, %v1831
    %v1833 = vpop.f32.mrf.mxu0
    %v1834 = vadd.f32 %v1820, %v1833
    %1835 = vdwg.mxu0
    %1836 = vmatpush.bf16.msra.mxu0 %v1423
    %1837 = vmatpush.bf16.msra.mxu0 %v1422
    %1838 = vmatpush.bf16.msra.mxu0 %v1421
    %1839 = vmatpush.bf16.msra.mxu0 %v1420
    %1840 = vmatpush.bf16.msra.mxu0 %v1419
    %1841 = vmatpush.bf16.msra.mxu0 %v1418
    %1842 = vmatpush.bf16.msra.mxu0 %v1417
    %1843 = vmatpush.bf16.msra.mxu0 %v1416
    %1844 = vmatmul.bf16.gmra.mxu0 %v558
    %v1845 = vpop.f32.mrf.mxu0
    %v1846 = vadd.f32 %v1832, %v1845
    %v1847 = vpop.f32.mrf.mxu0
    %v1848 = vadd.f32 %v1834, %v1847
    %1849 = vdwg.mxu0
    %1850 = vmatpush.bf16.msra.mxu0 %v1431
    %1851 = vmatpush.bf16.msra.mxu0 %v1430
    %1852 = vmatpush.bf16.msra.mxu0 %v1429
    %1853 = vmatpush.bf16.msra.mxu0 %v1428
    %1854 = vmatpush.bf16.msra.mxu0 %v1427
    %1855 = vmatpush.bf16.msra.mxu0 %v1426
    %1856 = vmatpush.bf16.msra.mxu0 %v1425
    %1857 = vmatpush.bf16.msra.mxu0 %v1424
    %1858 = vmatmul.bf16.gmra.mxu0 %v559
    %v1859 = vpop.f32.mrf.mxu0
    %v1860 = vadd.f32 %v1846, %v1859
    %v1861 = vpop.f32.mrf.mxu0
    %v1862 = vadd.f32 %v1848, %v1861
    %1863 = vdwg.mxu0
    %1864 = vmatpush.bf16.msra.mxu0 %v1439
    %1865 = vmatpush.bf16.msra.mxu0 %v1438
    %1866 = vmatpush.bf16.msra.mxu0 %v1437
    %1867 = vmatpush.bf16.msra.mxu0 %v1436
    %1868 = vmatpush.bf16.msra.mxu0 %v1435
    %1869 = vmatpush.bf16.msra.mxu0 %v1434
    %1870 = vmatpush.bf16.msra.mxu0 %v1433
    %1871 = vmatpush.bf16.msra.mxu0 %v1432
    %1872 = vmatmul.bf16.gmra.mxu0 %v560
    %v1873 = vpop.f32.mrf.mxu0
    %v1874 = vadd.f32 %v1860, %v1873
    %v1875 = vpop.f32.mrf.mxu0
    %v1876 = vadd.f32 %v1862, %v1875
    %1877 = vdwg.mxu0
    %1878 = vmatpush.bf16.msra.mxu0 %v1447
    %1879 = vmatpush.bf16.msra.mxu0 %v1446
    %1880 = vmatpush.bf16.msra.mxu0 %v1445
    %1881 = vmatpush.bf16.msra.mxu0 %v1444
    %1882 = vmatpush.bf16.msra.mxu0 %v1443
    %1883 = vmatpush.bf16.msra.mxu0 %v1442
    %1884 = vmatpush.bf16.msra.mxu0 %v1441
    %1885 = vmatpush.bf16.msra.mxu0 %v1440
    %1886 = vmatmul.bf16.gmra.mxu0 %v561
    %v1887 = vpop.f32.mrf.mxu0
    %v1888 = vadd.f32 %v1874, %v1887
    %v1889 = vpop.f32.mrf.mxu0
    %v1890 = vadd.f32 %v1876, %v1889
    %1891 = vdwg.mxu0
    %1892 = vmatpush.bf16.msra.mxu0 %v1455
    %1893 = vmatpush.bf16.msra.mxu0 %v1454
    %1894 = vmatpush.bf16.msra.mxu0 %v1453
    %1895 = vmatpush.bf16.msra.mxu0 %v1452
    %1896 = vmatpush.bf16.msra.mxu0 %v1451
    %1897 = vmatpush.bf16.msra.mxu0 %v1450
    %1898 = vmatpush.bf16.msra.mxu0 %v1449
    %1899 = vmatpush.bf16.msra.mxu0 %v1448
    %1900 = vmatmul.bf16.gmra.mxu0 %v562
    %v1901 = vpop.f32.mrf.mxu0
    %v1902 = vadd.f32 %v1888, %v1901
    %v1903 = vpop.f32.mrf.mxu0
    %v1904 = vadd.f32 %v1890, %v1903
    %1905 = vdwg.mxu0
    %1906 = vmatpush.bf16.msra.mxu0 %v1463
    %1907 = vmatpush.bf16.msra.mxu0 %v1462
    %1908 = vmatpush.bf16.msra.mxu0 %v1461
    %1909 = vmatpush.bf16.msra.mxu0 %v1460
    %1910 = vmatpush.bf16.msra.mxu0 %v1459
    %1911 = vmatpush.bf16.msra.mxu0 %v1458
    %1912 = vmatpush.bf16.msra.mxu0 %v1457
    %1913 = vmatpush.bf16.msra.mxu0 %v1456
    %1914 = vmatmul.bf16.gmra.mxu0 %v563
    %v1915 = vpop.f32.mrf.mxu0
    %v1916 = vadd.f32 %v1902, %v1915
    %v1917 = vpop.f32.mrf.mxu0
    %v1918 = vadd.f32 %v1904, %v1917
    %1919 = vdwg.mxu0
    %1920 = vmatpush.bf16.msra.mxu0 %v1471
    %1921 = vmatpush.bf16.msra.mxu0 %v1470
    %1922 = vmatpush.bf16.msra.mxu0 %v1469
    %1923 = vmatpush.bf16.msra.mxu0 %v1468
    %1924 = vmatpush.bf16.msra.mxu0 %v1467
    %1925 = vmatpush.bf16.msra.mxu0 %v1466
    %1926 = vmatpush.bf16.msra.mxu0 %v1465
    %1927 = vmatpush.bf16.msra.mxu0 %v1464
    %1928 = vmatmul.bf16.gmra.mxu0 %v564
    %v1929 = vpop.f32.mrf.mxu0
    %v1930 = vadd.f32 %v1916, %v1929
    %v1931 = vpop.f32.mrf.mxu0
    %v1932 = vadd.f32 %v1918, %v1931
    %1933 = vdwg.mxu0
    %1934 = vmatpush.bf16.msra.mxu0 %v1479
    %1935 = vmatpush.bf16.msra.mxu0 %v1478
    %1936 = vmatpush.bf16.msra.mxu0 %v1477
    %1937 = vmatpush.bf16.msra.mxu0 %v1476
    %1938 = vmatpush.bf16.msra.mxu0 %v1475
    %1939 = vmatpush.bf16.msra.mxu0 %v1474
    %1940 = vmatpush.bf16.msra.mxu0 %v1473
    %1941 = vmatpush.bf16.msra.mxu0 %v1472
    %1942 = vmatmul.bf16.gmra.mxu0 %v565
    %v1943 = vpop.f32.mrf.mxu0
    %v1944 = vadd.f32 %v1930, %v1943
    %v1945 = vpop.f32.mrf.mxu0
    %v1946 = vadd.f32 %v1932, %v1945
    %1947 = vdwg.mxu0
    %1948 = vmatpush.bf16.msra.mxu0 %v1487
    %1949 = vmatpush.bf16.msra.mxu0 %v1486
    %1950 = vmatpush.bf16.msra.mxu0 %v1485
    %1951 = vmatpush.bf16.msra.mxu0 %v1484
    %1952 = vmatpush.bf16.msra.mxu0 %v1483
    %1953 = vmatpush.bf16.msra.mxu0 %v1482
    %1954 = vmatpush.bf16.msra.mxu0 %v1481
    %1955 = vmatpush.bf16.msra.mxu0 %v1480
    %1956 = vmatmul.bf16.gmra.mxu0 %v566
    %v1957 = vpop.f32.mrf.mxu0
    %v1958 = vadd.f32 %v1944, %v1957
    %v1959 = vpop.f32.mrf.mxu0
    %v1960 = vadd.f32 %v1946, %v1959
    %1961 = vdwg.mxu0
    %1962 = vmatpush.bf16.msra.mxu0 %v1495
    %1963 = vmatpush.bf16.msra.mxu0 %v1494
    %1964 = vmatpush.bf16.msra.mxu0 %v1493
    %1965 = vmatpush.bf16.msra.mxu0 %v1492
    %1966 = vmatpush.bf16.msra.mxu0 %v1491
    %1967 = vmatpush.bf16.msra.mxu0 %v1490
    %1968 = vmatpush.bf16.msra.mxu0 %v1489
    %1969 = vmatpush.bf16.msra.mxu0 %v1488
    %1970 = vmatmul.bf16.gmra.mxu0 %v567
    %v1971 = vpop.f32.mrf.mxu0
    %v1972 = vadd.f32 %v1958, %v1971
    %v1973 = vpop.f32.mrf.mxu0
    %v1974 = vadd.f32 %v1960, %v1973
    %1975 = vdwg.mxu0
    %1976 = vmatpush.bf16.msra.mxu0 %v1503
    %1977 = vmatpush.bf16.msra.mxu0 %v1502
    %1978 = vmatpush.bf16.msra.mxu0 %v1501
    %1979 = vmatpush.bf16.msra.mxu0 %v1500
    %1980 = vmatpush.bf16.msra.mxu0 %v1499
    %1981 = vmatpush.bf16.msra.mxu0 %v1498
    %1982 = vmatpush.bf16.msra.mxu0 %v1497
    %1983 = vmatpush.bf16.msra.mxu0 %v1496
    %1984 = vmatmul.bf16.gmra.mxu0 %v568
    %v1985 = vpop.f32.mrf.mxu0
    %v1986 = vadd.f32 %v1972, %v1985
    %v1987 = vpop.f32.mrf.mxu0
    %v1988 = vadd.f32 %v1974, %v1987
    %1989 = vdwg.mxu0
    %1990 = vmatpush.bf16.msra.mxu0 %v1511
    %1991 = vmatpush.bf16.msra.mxu0 %v1510
    %1992 = vmatpush.bf16.msra.mxu0 %v1509
    %1993 = vmatpush.bf16.msra.mxu0 %v1508
    %1994 = vmatpush.bf16.msra.mxu0 %v1507
    %1995 = vmatpush.bf16.msra.mxu0 %v1506
    %1996 = vmatpush.bf16.msra.mxu0 %v1505
    %1997 = vmatpush.bf16.msra.mxu0 %v1504
    %1998 = vmatmul.bf16.gmra.mxu0 %v569
    %v1999 = vpop.f32.mrf.mxu0
    %v2000 = vadd.f32 %v1986, %v1999
    %v2001 = vpop.f32.mrf.mxu0
    %v2002 = vadd.f32 %v1988, %v2001
    %2003 = vdwg.mxu0
    %2004 = vmatpush.bf16.msra.mxu0 %v1519
    %2005 = vmatpush.bf16.msra.mxu0 %v1518
    %2006 = vmatpush.bf16.msra.mxu0 %v1517
    %2007 = vmatpush.bf16.msra.mxu0 %v1516
    %2008 = vmatpush.bf16.msra.mxu0 %v1515
    %2009 = vmatpush.bf16.msra.mxu0 %v1514
    %2010 = vmatpush.bf16.msra.mxu0 %v1513
    %2011 = vmatpush.bf16.msra.mxu0 %v1512
    %2012 = vmatmul.bf16.gmra.mxu0 %v570
    %v2013 = vpop.f32.mrf.mxu0
    %v2014 = vadd.f32 %v2000, %v2013
    %v2015 = vpop.f32.mrf.mxu0
    %v2016 = vadd.f32 %v2002, %v2015
    %2017 = vdwg.mxu0
    %2018 = vmatpush.bf16.msra.mxu0 %v1527
    %2019 = vmatpush.bf16.msra.mxu0 %v1526
    %2020 = vmatpush.bf16.msra.mxu0 %v1525
    %2021 = vmatpush.bf16.msra.mxu0 %v1524
    %2022 = vmatpush.bf16.msra.mxu0 %v1523
    %2023 = vmatpush.bf16.msra.mxu0 %v1522
    %2024 = vmatpush.bf16.msra.mxu0 %v1521
    %2025 = vmatpush.bf16.msra.mxu0 %v1520
    %2026 = vmatmul.bf16.gmra.mxu0 %v571
    %v2027 = vpop.f32.mrf.mxu0
    %v2028 = vadd.f32 %v2014, %v2027
    %v2029 = vpop.f32.mrf.mxu0
    %v2030 = vadd.f32 %v2016, %v2029
    %2031 = vdwg.mxu0
    %2032 = vmatpush.bf16.msra.mxu0 %v1535
    %2033 = vmatpush.bf16.msra.mxu0 %v1534
    %2034 = vmatpush.bf16.msra.mxu0 %v1533
    %2035 = vmatpush.bf16.msra.mxu0 %v1532
    %2036 = vmatpush.bf16.msra.mxu0 %v1531
    %2037 = vmatpush.bf16.msra.mxu0 %v1530
    %2038 = vmatpush.bf16.msra.mxu0 %v1529
    %2039 = vmatpush.bf16.msra.mxu0 %v1528
    %2040 = vmatmul.bf16.gmra.mxu0 %v572
    %v2041 = vpop.f32.mrf.mxu0
    %v2042 = vadd.f32 %v2028, %v2041
    %v2043 = vpop.f32.mrf.mxu0
    %v2044 = vadd.f32 %v2030, %v2043
    %2045 = vdwg.mxu0
    %2046 = vmatpush.bf16.msra.mxu0 %v1543
    %2047 = vmatpush.bf16.msra.mxu0 %v1542
    %2048 = vmatpush.bf16.msra.mxu0 %v1541
    %2049 = vmatpush.bf16.msra.mxu0 %v1540
    %2050 = vmatpush.bf16.msra.mxu0 %v1539
    %2051 = vmatpush.bf16.msra.mxu0 %v1538
    %2052 = vmatpush.bf16.msra.mxu0 %v1537
    %2053 = vmatpush.bf16.msra.mxu0 %v1536
    %2054 = vmatmul.bf16.gmra.mxu0 %v573
    %v2055 = vpop.f32.mrf.mxu0
    %v2056 = vadd.f32 %v2042, %v2055
    %v2057 = vpop.f32.mrf.mxu0
    %v2058 = vadd.f32 %v2044, %v2057
    %2059 = vdwg.mxu0
    %2060 = vmatpush.bf16.msra.mxu0 %v1551
    %2061 = vmatpush.bf16.msra.mxu0 %v1550
    %2062 = vmatpush.bf16.msra.mxu0 %v1549
    %2063 = vmatpush.bf16.msra.mxu0 %v1548
    %2064 = vmatpush.bf16.msra.mxu0 %v1547
    %2065 = vmatpush.bf16.msra.mxu0 %v1546
    %2066 = vmatpush.bf16.msra.mxu0 %v1545
    %2067 = vmatpush.bf16.msra.mxu0 %v1544
    %2068 = vmatmul.bf16.gmra.mxu0 %v574
    %v2069 = vpop.f32.mrf.mxu0
    %v2070 = vadd.f32 %v2056, %v2069
    %v2071 = vpop.f32.mrf.mxu0
    %v2072 = vadd.f32 %v2058, %v2071
    %2073 = vdwg.mxu0
    %2074 = vmatpush.bf16.msra.mxu0 %v1559
    %2075 = vmatpush.bf16.msra.mxu0 %v1558
    %2076 = vmatpush.bf16.msra.mxu0 %v1557
    %2077 = vmatpush.bf16.msra.mxu0 %v1556
    %2078 = vmatpush.bf16.msra.mxu0 %v1555
    %2079 = vmatpush.bf16.msra.mxu0 %v1554
    %2080 = vmatpush.bf16.msra.mxu0 %v1553
    %2081 = vmatpush.bf16.msra.mxu0 %v1552
    %2082 = vmatmul.bf16.gmra.mxu0 %v575
    %v2083 = vpop.f32.mrf.mxu0
    %v2084 = vadd.f32 %v2070, %v2083
    %v2085 = vpop.f32.mrf.mxu0
    %v2086 = vadd.f32 %v2072, %v2085
    %2087 = vdwg.mxu0
    %v2088 = vmax.f32 %v2084, 0.0
    %v2089 = vmax.f32 %v2086, 0.0
    %v2090 = vpack.c.bf16 %v2089, %v2088
    %v2091 = vld [vmem:[#allocation7] sm:$0xf]
    %v2092 = vld [vmem:[#allocation7 + $0x4] sm:$0xf]
    %v2093 = vld [vmem:[#allocation7 + $0x8] sm:$0xf]
    %v2094 = vld [vmem:[#allocation7 + $0xc] sm:$0xf]
    %v2095 = vld [vmem:[#allocation7 + $0x10] sm:$0xf]
    %v2096 = vld [vmem:[#allocation7 + $0x14] sm:$0xf]
    %v2097 = vld [vmem:[#allocation7 + $0x18] sm:$0xf]
    %v2098 = vld [vmem:[#allocation7 + $0x1c] sm:$0xf]
    %v2099 = vld [vmem:[#allocation7 + $0x20] sm:$0xf]
    %v2100 = vld [vmem:[#allocation7 + $0x24] sm:$0xf]
    %v2101 = vld [vmem:[#allocation7 + $0x28] sm:$0xf]
    %v2102 = vld [vmem:[#allocation7 + $0x2c] sm:$0xf]
    %v2103 = vld [vmem:[#allocation7 + $0x30] sm:$0xf]
    %v2104 = vld [vmem:[#allocation7 + $0x34] sm:$0xf]
    %v2105 = vld [vmem:[#allocation7 + $0x38] sm:$0xf]
    %v2106 = vld [vmem:[#allocation7 + $0x3c] sm:$0xf]
    %v2107 = vld [vmem:[%s4] sm:$0x1]
    %v2109 = vperm.slane %v2107, 0
    %v2127 = vunpack.c.l.b16 %v2091
    %v2128 = vunpack.c.l.b16 %v2092
    %v2129 = vunpack.c.l.b16 %v2093
    %v2130 = vunpack.c.l.b16 %v2094
    %v2131 = vunpack.c.l.b16 %v2095
    %v2132 = vunpack.c.l.b16 %v2096
    %v2133 = vunpack.c.l.b16 %v2097
    %v2134 = vunpack.c.l.b16 %v2098
    %v2135 = vunpack.c.l.b16 %v2099
    %v2136 = vunpack.c.l.b16 %v2100
    %v2137 = vunpack.c.l.b16 %v2101
    %v2138 = vunpack.c.l.b16 %v2102
    %v2139 = vunpack.c.l.b16 %v2103
    %v2140 = vunpack.c.l.b16 %v2104
    %v2141 = vunpack.c.l.b16 %v2105
    %v2142 = vunpack.c.l.b16 %v2106
    %v2143 = vpack.c.b16 %v2128, %v2127
    %v2144 = vpack.c.b16 %v2130, %v2129
    %v2145 = vpack.c.b16 %v2132, %v2131
    %v2146 = vpack.c.b16 %v2134, %v2133
    %v2147 = vpack.c.b16 %v2136, %v2135
    %v2148 = vpack.c.b16 %v2138, %v2137
    %v2149 = vpack.c.b16 %v2140, %v2139
    %v2150 = vpack.c.b16 %v2142, %v2141
    %2159 = vmatpush.bf16.msra.mxu0 %v2150
    %2160 = vmatpush.bf16.msra.mxu0 %v2149
    %2161 = vmatpush.bf16.msra.mxu0 %v2148
    %2162 = vmatpush.bf16.msra.mxu0 %v2147
    %2163 = vmatpush.bf16.msra.mxu0 %v2146
    %2164 = vmatpush.bf16.msra.mxu0 %v2145
    %2165 = vmatpush.bf16.msra.mxu0 %v2144
    %2166 = vmatpush.bf16.msra.mxu0 %v2143
    %2167 = vmatmul.bf16.gmra.mxu0 %v2090
    %v2168 = vpop.f32.mrf.mxu0
    %v2169 = vadd.f32 %v2109, %v2168
    %v2170 = vpop.f32.mrf.mxu0
    %v2171 = vadd.f32 %v2109, %v2170
    %2172 = vdwg.mxu0
    %2173 = vst [vmem:[#allocation8] sm:$0xff] %v2169
    %2174 = vst [vmem:[#allocation8 + $0x8] sm:$0xff] %v2171
    // Predicated region
    $region34: #{tpu_custom_call.1} parent=1 // pred_check
      _
    $region35: #{tpu_custom_call.1} parent=1 // pred_check_branch
      %2176 = sbr.rel (0) target = $region37
    $region36: #{tpu_custom_call.1} parent=1 // pred_region
      %2178 = vsyncadd [#allocation4], 0
      %s2179 = sshll.u32 [#allocation8], 4
      %s2180 = int_to_ptr.vmem [resolvable:$true] %s2179
      %s2181 = sshll.u32 %s5, 4
      %s2182 = int_to_ptr.hbm [resolvable:$true] %s2181
      %2187 = dma.vmem_to_hbm [thread:$0]  %s2180, 256, %s2182, [#allocation4], 128, 128, 8
    $region37: #{tpu_custom_call.1} parent=1 // pred_fallthru
      _
    // Predicated region
    $region38: #{tpu_custom_call.1} parent=1 // pred_check
      _
    $region39: #{tpu_custom_call.1} parent=1 // pred_check_branch
      %2189 = sbr.rel (0) target = $region41
    $region40: #{tpu_custom_call.1} parent=1 // pred_region
      %2191 = dma.done [#allocation4], 256
    $region41: #{tpu_custom_call.1} parent=1 // pred_fallthru
      _
    %2192 = vsyncpa [#allocation3], 1
    %2193 = vsyncpa [#allocation6], 1
    %2194 = vsyncpa [#allocation4], 1

</llo_original>
